<compile_context>
chip_gen: v7x
topology: tpu7x:2x2x1
jax: 0.10.0
libtpu: 0.0.40
codegen_flags: <defaults>
</compile_context>

<pallas_src>
import functools
import math

import jax
import jax.numpy as jnp
from jax.experimental import pallas as pl
from jax.experimental.pallas import tpu as pltpu


def _xattn_kernel(x_ref, c_ref, maskadd_ref,
                  wq_ref, bq_ref,          # (H, H) bf16, (1, H) f32   (1/sqrt(hd) pre-folded)
                  wkv_ref, bkv_ref,        # (H, 2H) bf16, (1, 2H) f32 (K|V fused)
                  wo_ref, bo_ref,          # (H, H) bf16, (1, H) f32
                  wd_ref, bd_ref,          # (H, H) bf16, (1, H) f32
                  ln_g_ref, ln_b_ref,      # (1, H) f32
                  out_ref,
                  o_scr,                   # (tq, H) bf16 VMEM scratch: head-merged attn values
                  *, num_heads, eps):
    f32 = jnp.float32
    bf16 = jnp.bfloat16

    x_f32 = x_ref[0]                      # (tq, H) f32 -- kept for residual / LayerNorm
    x_bf = x_f32.astype(bf16)
    c_bf = c_ref[0].astype(bf16)          # cast in VMEM (saves the wrapper-side HBM pass)

    tq, hidden = x_f32.shape
    lk = c_bf.shape[0]
    hd = hidden // num_heads

    # --- full-width projections (MXU-saturating output dims) ---
    q_all = (jnp.dot(x_bf, wq_ref[...], preferred_element_type=f32)
             + bq_ref[...]).astype(bf16)                                             # (tq, H)
    kv_all = jnp.dot(c_bf, wkv_ref[...], preferred_element_type=f32) + bkv_ref[...]  # (Lk, 2H)
    k_all = kv_all[:, :hidden].astype(bf16)
    v_all = kv_all[:, hidden:].astype(bf16)

    # additive key-padding mask, broadcast once (JAX does not CSE broadcast_in_dim)
    mask_b = jnp.broadcast_to(maskadd_ref[0], (tq, lk))                              # (tq, Lk)

    # TODO(synk): for production num_heads / H convert this static unroll to lax.fori_loop
    # (or a heads grid axis) to bound live ranges; at these head counts the unroll is fine.
    for h in range(num_heads):
        lo = h * hd
        qh = q_all[:, lo:lo + hd]
        kh = k_all[:, lo:lo + hd]
        vh = v_all[:, lo:lo + hd]

        # scores = qh @ kh.T without an explicit transpose (contract on head_dim)
        scores = jax.lax.dot_general(qh, kh, (((1,), (1,)), ((), ())),
                                     preferred_element_type=f32)                     # (tq, Lk)
        scores = scores + mask_b

        m = jnp.max(scores, axis=-1, keepdims=True)
        e = jnp.exp(scores - m)
        denom = jnp.sum(e, axis=-1, keepdims=True)                                   # (tq, 1)

        # unnormalized weighted values, then one cheap EUP reciprocal on the row sums
        oh = jnp.dot(e.astype(bf16), vh, preferred_element_type=f32)                 # (tq, hd)
        oh = oh * pl.reciprocal(denom, approx=True)

        # head merge = lane-slot write into the scratch slab (no concatenate)
        o_scr[:, lo:lo + hd] = oh.astype(bf16)

    # single deep (K = H) out-projection
    attn_out = jnp.dot(o_scr[...], wo_ref[...], preferred_element_type=f32) + bo_ref[...]

    # --- BertSelfOutput: LayerNorm(dense(attn_out) + input_tensor) ---
    dense = jnp.dot(attn_out.astype(bf16), wd_ref[...],
                    preferred_element_type=f32) + bd_ref[...]
    y = dense + x_f32
    mu = jnp.mean(y, axis=-1, keepdims=True)
    var = jnp.mean((y - mu) ** 2, axis=-1, keepdims=True)
    ln = (y - mu) * jax.lax.rsqrt(var + eps)
    ln = ln * ln_g_ref[...] + ln_b_ref[...]

    # attention_output = output + self.output(output, input_tensor)
    out_ref[0] = (attn_out + ln).astype(out_ref.dtype)


def prepare_params(params, *, num_heads):
    """One-time weight preprocessing: transpose to x@W layout, fuse K|V, fold 1/sqrt(hd)
    into Wq/bq, cast MXU operands to bf16. Call once and cache; NOT per forward step."""
    H = params["dense_weight"].shape[0]
    hd = H // num_heads
    scale = 1.0 / math.sqrt(hd)

    w_in = params["in_proj_weight"]            # (3H, H)  torch layout: y = x @ W.T + b
    b_in = params["in_proj_bias"]              # (3H,)

    wq = (w_in[:H].T * scale).astype(jnp.bfloat16)                                   # (H, H)
    bq = (b_in[:H] * scale).reshape(1, H).astype(jnp.float32)
    wkv = jnp.concatenate([w_in[H:2 * H].T, w_in[2 * H:].T], axis=1).astype(jnp.bfloat16)  # (H,2H)
    bkv = jnp.concatenate([b_in[H:2 * H], b_in[2 * H:]]).reshape(1, 2 * H).astype(jnp.float32)

    return {
        "wq": wq, "bq": bq, "wkv": wkv, "bkv": bkv,
        "wo": params["out_proj_weight"].T.astype(jnp.bfloat16),                      # (H, H)
        "bo": params["out_proj_bias"].reshape(1, H).astype(jnp.float32),
        "wd": params["dense_weight"].T.astype(jnp.bfloat16),                         # (H, H)
        "bd": params["dense_bias"].reshape(1, H).astype(jnp.float32),
        "ln_g": params["ln_gamma"].reshape(1, H).astype(jnp.float32),
        "ln_b": params["ln_beta"].reshape(1, H).astype(jnp.float32),
    }


def input_x_attention(input_tensor, ctx_tensor, input_mask, ctx_att_mask, prepared,
                      *, num_heads, eps=1e-12, q_block=256):
    """Pallas implementation of InputXAttention.forward (input_mask unused, as in torch)."""
    del input_mask
    B, Lq, H = input_tensor.shape
    _, Lk, _ = ctx_tensor.shape

    # additive key-padding mask (finite -1e30: fully-masked rows average V instead of NaN)
    mask_add = jnp.where(ctx_att_mask.reshape(B, 1, Lk) != 0, -1e30, 0.0).astype(jnp.float32)

    tq = min(Lq, q_block)
    if Lq % tq != 0:
        tq = Lq          # TODO(synk): pad/mask ragged Lq tiles instead of this fallback

    kernel = functools.partial(_xattn_kernel, num_heads=num_heads, eps=eps)

    # constant-index weights/biases: single-buffered (double-buffering constants only
    # doubles their VMEM footprint)
    def wspec(shape):
        return pl.BlockSpec(shape, lambda b, qi: (0,) * len(shape),
                            pipeline_mode=pl.Buffered(1))

    return pl.pallas_call(
        kernel,
        out_shape=jax.ShapeDtypeStruct((B, Lq, H), input_tensor.dtype),
        grid_spec=pltpu.PrefetchScalarGridSpec(
            num_scalar_prefetch=0,
            grid=(B, Lq // tq),
            in_specs=[
                pl.BlockSpec((1, tq, H), lambda b, qi: (b, qi, 0)),   # input_tensor (f32)
                pl.BlockSpec((1, Lk, H), lambda b, qi: (b, 0, 0)),    # ctx_tensor (f32, cast in VMEM)
                pl.BlockSpec((1, 1, Lk), lambda b, qi: (b, 0, 0)),    # additive key mask
                wspec((H, H)),          # wq (scale folded)
                wspec((1, H)),          # bq (scale folded)
                wspec((H, 2 * H)),      # wkv
                wspec((1, 2 * H)),      # bkv
                wspec((H, H)),          # wo
                wspec((1, H)),          # bo
                wspec((H, H)),          # wd (pre-transposed dense)
                wspec((1, H)),          # bd
                wspec((1, H)),          # ln gamma
                wspec((1, H)),          # ln beta
            ],
            out_specs=pl.BlockSpec((1, tq, H), lambda b, qi: (b, qi, 0)),
            scratch_shapes=[pltpu.VMEM((tq, H), jnp.bfloat16)],
        ),
        compiler_params=pltpu.CompilerParams(
            dimension_semantics=("parallel", "parallel"),   # batch and Lq tiles independent
            vmem_limit_bytes=64 * 1024 * 1024),
    )(input_tensor, ctx_tensor, mask_add,
      prepared["wq"], prepared["bq"], prepared["wkv"], prepared["bkv"],
      prepared["wo"], prepared["bo"], prepared["wd"], prepared["bd"],
      prepared["ln_g"], prepared["ln_b"])


def init_params(key, hidden):
    ks = jax.random.split(key, 3)
    s = 0.02
    return {
        "in_proj_weight": jax.random.normal(ks[0], (3 * hidden, hidden), jnp.float32) * s,
        "in_proj_bias": jnp.zeros((3 * hidden,), jnp.float32),
        "out_proj_weight": jax.random.normal(ks[1], (hidden, hidden), jnp.float32) * s,
        "out_proj_bias": jnp.zeros((hidden,), jnp.float32),
        "dense_weight": jax.random.normal(ks[2], (hidden, hidden), jnp.float32) * s,
        "dense_bias": jnp.zeros((hidden,), jnp.float32),
        "ln_gamma": jnp.ones((hidden,), jnp.float32),
        "ln_beta": jnp.zeros((hidden,), jnp.float32),
    }


def _reference(x, c, ctx_att_mask, params, num_heads, eps):
    """Pure-JAX f32 reference mirroring torch nn.MultiheadAttention + BertSelfOutput."""
    B, Lq, H = x.shape
    _, Lk, _ = c.shape
    hd = H // num_heads
    w_in, b_in = params["in_proj_weight"], params["in_proj_bias"]
    q = x @ w_in[:H].T + b_in[:H]
    k = c @ w_in[H:2 * H].T + b_in[H:2 * H]
    v = c @ w_in[2 * H:].T + b_in[2 * H:]
    sp = lambda t, L: t.reshape(B, L, num_heads, hd).transpose(0, 2, 1, 3)
    qh, kh, vh = sp(q, Lq), sp(k, Lk), sp(v, Lk)
    scores = jnp.einsum("bnqd,bnkd->bnqk", qh, kh) / jnp.sqrt(hd)
    mask_add = jnp.where(ctx_att_mask.reshape(B, 1, 1, Lk) != 0, -1e30, 0.0)
    p = jax.nn.softmax(scores + mask_add, axis=-1)
    o = jnp.einsum("bnqk,bnkd->bnqd", p, vh).transpose(0, 2, 1, 3).reshape(B, Lq, H)
    attn = o @ params["out_proj_weight"].T + params["out_proj_bias"]
    dense = attn @ params["dense_weight"].T + params["dense_bias"]
    y = dense + x
    mu = y.mean(-1, keepdims=True)
    var = ((y - mu) ** 2).mean(-1, keepdims=True)
    ln = (y - mu) / jnp.sqrt(var + eps) * params["ln_gamma"] + params["ln_beta"]
    return attn + ln


if __name__ == "__main__":
    B, Lq, Lk, H, NH = 2, 8, 16, 32, 4

    key = jax.random.PRNGKey(0)
    k_x, k_c, k_p = jax.random.split(key, 3)

    input_tensor = jax.random.normal(k_x, (B, Lq, H), jnp.float32)
    ctx_tensor = jax.random.normal(k_c, (B, Lk, H), jnp.float32)
    input_mask = jnp.ones((B, 1, 1, Lq), jnp.float32)            # unused (as in torch forward)
    # nonzero => key masked out (torch key_padding_mask .bool() semantics)
    ctx_att_mask = jnp.zeros((B, 1, 1, Lk), jnp.float32).at[:, :, :, Lk - 4:].set(1.0)

    params = init_params(k_p, H)
    prepared = prepare_params(params, num_heads=NH)   # one-time preprocessing, outside hot path

    fn = jax.jit(functools.partial(input_x_attention, num_heads=NH, eps=1e-12))
    out = fn(input_tensor, ctx_tensor, input_mask, ctx_att_mask, prepared)
    out = jax.block_until_ready(out)

    assert out.shape == (B, Lq, H)
    assert bool(jnp.all(jnp.isfinite(out)))

    ref = _reference(input_tensor, ctx_tensor, ctx_att_mask, params, NH, 1e-12)
    max_err = float(jnp.max(jnp.abs(out - ref)))
    assert max_err < 0.1, f"max abs error vs f32 reference too large: {max_err}"

    print("KERNEL_OK")
</pallas_src>

<mosaic_0001>
module attributes {stable_mosaic.version = 11 : i64} {
  func.func @_xattn_kernel(%arg0: i32, %arg1: i32, %arg2: memref<1x8x32xf32, #tpu.memory_space<vmem>>, %arg3: memref<1x16x32xf32, #tpu.memory_space<vmem>>, %arg4: memref<1x1x16xf32, #tpu.memory_space<vmem>>, %arg5: memref<32x32xbf16, #tpu.memory_space<vmem>>, %arg6: memref<1x32xf32, #tpu.memory_space<vmem>>, %arg7: memref<32x64xbf16, #tpu.memory_space<vmem>>, %arg8: memref<1x64xf32, #tpu.memory_space<vmem>>, %arg9: memref<32x32xbf16, #tpu.memory_space<vmem>>, %arg10: memref<1x32xf32, #tpu.memory_space<vmem>>, %arg11: memref<32x32xbf16, #tpu.memory_space<vmem>>, %arg12: memref<1x32xf32, #tpu.memory_space<vmem>>, %arg13: memref<1x32xf32, #tpu.memory_space<vmem>>, %arg14: memref<1x32xf32, #tpu.memory_space<vmem>>, %arg15: memref<1x8x32xf32, #tpu.memory_space<vmem>>, %arg16: memref<8x32xbf16, #tpu.memory_space<vmem>>) attributes {dimension_semantics = [#tpu.dimension_semantics<parallel>, #tpu.dimension_semantics<parallel>], iteration_bounds = array<i64: 2, 1>, scalar_prefetch = 0 : i64, scratch_operands = 1 : i64, tpu.core_type = #tpu.core_type<tc>, window_params = [{transform_indices = @transform_0, window_bounds = array<i64: 1, 8, 32>}, {transform_indices = @transform_1, window_bounds = array<i64: 1, 16, 32>}, {transform_indices = @transform_2, window_bounds = array<i64: 1, 1, 16>}, {pipeline_mode = #tpu.pipeline_mode<synchronous>, transform_indices = @transform_3, window_bounds = array<i64: 32, 32>}, {pipeline_mode = #tpu.pipeline_mode<synchronous>, transform_indices = @transform_4, window_bounds = array<i64: 1, 32>}, {pipeline_mode = #tpu.pipeline_mode<synchronous>, transform_indices = @transform_5, window_bounds = array<i64: 32, 64>}, {pipeline_mode = #tpu.pipeline_mode<synchronous>, transform_indices = @transform_6, window_bounds = array<i64: 1, 64>}, {pipeline_mode = #tpu.pipeline_mode<synchronous>, transform_indices = @transform_7, window_bounds = array<i64: 32, 32>}, {pipeline_mode = #tpu.pipeline_mode<synchronous>, transform_indices = @transform_8, window_bounds = array<i64: 1, 32>}, {pipeline_mode = #tpu.pipeline_mode<synchronous>, transform_indices = @transform_9, window_bounds = array<i64: 32, 32>}, {pipeline_mode = #tpu.pipeline_mode<synchronous>, transform_indices = @transform_10, window_bounds = array<i64: 1, 32>}, {pipeline_mode = #tpu.pipeline_mode<synchronous>, transform_indices = @transform_11, window_bounds = array<i64: 1, 32>}, {pipeline_mode = #tpu.pipeline_mode<synchronous>, transform_indices = @transform_12, window_bounds = array<i64: 1, 32>}, {transform_indices = @transform_13, window_bounds = array<i64: 1, 8, 32>}]} {
    %c0 = arith.constant 0 : index
    %c0_0 = arith.constant 0 : index
    %c0_1 = arith.constant 0 : index
    %0 = vector.load %arg2[%c0, %c0_0, %c0_1] : memref<1x8x32xf32, #tpu.memory_space<vmem>>, vector<1x8x32xf32>
    %1 = vector.shape_cast %0 : vector<1x8x32xf32> to vector<8x32xf32>
    %2 = arith.truncf %1 : vector<8x32xf32> to vector<8x32xbf16>
    %c0_2 = arith.constant 0 : index
    %c0_3 = arith.constant 0 : index
    %c0_4 = arith.constant 0 : index
    %3 = vector.load %arg3[%c0_2, %c0_3, %c0_4] : memref<1x16x32xf32, #tpu.memory_space<vmem>>, vector<1x16x32xf32>
    %4 = vector.shape_cast %3 : vector<1x16x32xf32> to vector<16x32xf32>
    %5 = arith.truncf %4 : vector<16x32xf32> to vector<16x32xbf16>
    %c0_5 = arith.constant 0 : index
    %c0_6 = arith.constant 0 : index
    %6 = vector.load %arg5[%c0_5, %c0_6] : memref<32x32xbf16, #tpu.memory_space<vmem>>, vector<32x32xbf16>
    %cst = arith.constant dense<0.000000e+00> : vector<8x32xf32>
    %7 = tpu.matmul %2, %6, %cst {dimension_numbers = #tpu.dot_dimension_numbers<[1], [0], [0], [1], [0, 0, 1, 1], [], []>} : vector<8x32xbf16>, vector<32x32xbf16>, vector<8x32xf32> -> vector<8x32xf32>
    %c0_7 = arith.constant 0 : index
    %c0_8 = arith.constant 0 : index
    %8 = vector.load %arg6[%c0_7, %c0_8] : memref<1x32xf32, #tpu.memory_space<vmem>>, vector<1x32xf32>
    %9 = vector.broadcast %8 : vector<1x32xf32> to vector<8x32xf32>
    %10 = arith.addf %7, %9 : vector<8x32xf32>
    %11 = arith.truncf %10 : vector<8x32xf32> to vector<8x32xbf16>
    %c0_9 = arith.constant 0 : index
    %c0_10 = arith.constant 0 : index
    %12 = vector.load %arg7[%c0_9, %c0_10] : memref<32x64xbf16, #tpu.memory_space<vmem>>, vector<32x64xbf16>
    %cst_11 = arith.constant dense<0.000000e+00> : vector<16x64xf32>
    %13 = tpu.matmul %5, %12, %cst_11 {dimension_numbers = #tpu.dot_dimension_numbers<[1], [0], [0], [1], [0, 0, 1, 1], [], []>} : vector<16x32xbf16>, vector<32x64xbf16>, vector<16x64xf32> -> vector<16x64xf32>
    %c0_12 = arith.constant 0 : index
    %c0_13 = arith.constant 0 : index
    %14 = vector.load %arg8[%c0_12, %c0_13] : memref<1x64xf32, #tpu.memory_space<vmem>>, vector<1x64xf32>
    %15 = vector.broadcast %14 : vector<1x64xf32> to vector<16x64xf32>
    %16 = arith.addf %13, %15 : vector<16x64xf32>
    %17 = vector.extract_strided_slice %16 {offsets = [0, 0], sizes = [16, 32], strides = [1, 1]} : vector<16x64xf32> to vector<16x32xf32>
    %18 = arith.truncf %17 : vector<16x32xf32> to vector<16x32xbf16>
    %19 = vector.extract_strided_slice %16 {offsets = [0, 32], sizes = [16, 32], strides = [1, 1]} : vector<16x64xf32> to vector<16x32xf32>
    %20 = arith.truncf %19 : vector<16x32xf32> to vector<16x32xbf16>
    %c0_14 = arith.constant 0 : index
    %c0_15 = arith.constant 0 : index
    %c0_16 = arith.constant 0 : index
    %21 = vector.load %arg4[%c0_14, %c0_15, %c0_16] : memref<1x1x16xf32, #tpu.memory_space<vmem>>, vector<1x1x16xf32>
    %22 = vector.shape_cast %21 : vector<1x1x16xf32> to vector<1x16xf32>
    %23 = vector.shape_cast %22 : vector<1x16xf32> to vector<1x16xf32>
    %24 = vector.broadcast %23 : vector<1x16xf32> to vector<8x16xf32>
    %25 = vector.extract_strided_slice %11 {offsets = [0, 0], sizes = [8, 8], strides = [1, 1]} : vector<8x32xbf16> to vector<8x8xbf16>
    %26 = vector.extract_strided_slice %18 {offsets = [0, 0], sizes = [16, 8], strides = [1, 1]} : vector<16x32xbf16> to vector<16x8xbf16>
    %27 = vector.extract_strided_slice %20 {offsets = [0, 0], sizes = [16, 8], strides = [1, 1]} : vector<16x32xbf16> to vector<16x8xbf16>
    %cst_17 = arith.constant dense<0.000000e+00> : vector<8x16xf32>
    %28 = tpu.matmul %25, %26, %cst_17 {dimension_numbers = #tpu.dot_dimension_numbers<[1], [1], [0], [0], [0, 0, 1, 0], [], []>} : vector<8x8xbf16>, vector<16x8xbf16>, vector<8x16xf32> -> vector<8x16xf32>
    %29 = arith.addf %28, %24 : vector<8x16xf32>
    %cst_18 = arith.constant dense<0xFF800000> : vector<8xf32>
    %30 = vector.multi_reduction <maximumf>, %29, %cst_18 [1] : vector<8x16xf32> to vector<8xf32>
    %31 = vector.shape_cast %30 : vector<8xf32> to vector<8x1xf32>
    %32 = vector.broadcast %31 : vector<8x1xf32> to vector<8x16xf32>
    %33 = arith.subf %29, %32 : vector<8x16xf32>
    %34 = math.exp %33 : vector<8x16xf32>
    %cst_19 = arith.constant dense<0.000000e+00> : vector<8xf32>
    %35 = vector.multi_reduction <add>, %34, %cst_19 [1] : vector<8x16xf32> to vector<8xf32>
    %36 = vector.shape_cast %35 : vector<8xf32> to vector<8x1xf32>
    %37 = arith.truncf %34 : vector<8x16xf32> to vector<8x16xbf16>
    %cst_20 = arith.constant dense<0.000000e+00> : vector<8x8xf32>
    %38 = tpu.matmul %37, %27, %cst_20 {dimension_numbers = #tpu.dot_dimension_numbers<[1], [0], [0], [1], [0, 0, 1, 1], [], []>} : vector<8x16xbf16>, vector<16x8xbf16>, vector<8x8xf32> -> vector<8x8xf32>
    %39 = tpu.reciprocal %36 {approx = true} : vector<8x1xf32> -> vector<8x1xf32>
    %40 = vector.broadcast %39 : vector<8x1xf32> to vector<8x8xf32>
    %41 = arith.mulf %38, %40 : vector<8x8xf32>
    %42 = arith.truncf %41 : vector<8x8xf32> to vector<8x8xbf16>
    %c0_21 = arith.constant 0 : index
    %c0_22 = arith.constant 0 : index
    %43 = vector.load %arg16[%c0_21, %c0_22] : memref<8x32xbf16, #tpu.memory_space<vmem>>, vector<8x8xbf16>
    tpu.vector_store %arg16[%c0_21, %c0_22], %42 {strides = array<i32>} : memref<8x32xbf16, #tpu.memory_space<vmem>>, vector<8x8xbf16>,
    %44 = vector.extract_strided_slice %11 {offsets = [0, 8], sizes = [8, 8], strides = [1, 1]} : vector<8x32xbf16> to vector<8x8xbf16>
    %45 = vector.extract_strided_slice %18 {offsets = [0, 8], sizes = [16, 8], strides = [1, 1]} : vector<16x32xbf16> to vector<16x8xbf16>
    %46 = vector.extract_strided_slice %20 {offsets = [0, 8], sizes = [16, 8], strides = [1, 1]} : vector<16x32xbf16> to vector<16x8xbf16>
    %cst_23 = arith.constant dense<0.000000e+00> : vector<8x16xf32>
    %47 = tpu.matmul %44, %45, %cst_23 {dimension_numbers = #tpu.dot_dimension_numbers<[1], [1], [0], [0], [0, 0, 1, 0], [], []>} : vector<8x8xbf16>, vector<16x8xbf16>, vector<8x16xf32> -> vector<8x16xf32>
    %48 = arith.addf %47, %24 : vector<8x16xf32>
    %cst_24 = arith.constant dense<0xFF800000> : vector<8xf32>
    %49 = vector.multi_reduction <maximumf>, %48, %cst_24 [1] : vector<8x16xf32> to vector<8xf32>
    %50 = vector.shape_cast %49 : vector<8xf32> to vector<8x1xf32>
    %51 = vector.broadcast %50 : vector<8x1xf32> to vector<8x16xf32>
    %52 = arith.subf %48, %51 : vector<8x16xf32>
    %53 = math.exp %52 : vector<8x16xf32>
    %cst_25 = arith.constant dense<0.000000e+00> : vector<8xf32>
    %54 = vector.multi_reduction <add>, %53, %cst_25 [1] : vector<8x16xf32> to vector<8xf32>
    %55 = vector.shape_cast %54 : vector<8xf32> to vector<8x1xf32>
    %56 = arith.truncf %53 : vector<8x16xf32> to vector<8x16xbf16>
    %cst_26 = arith.constant dense<0.000000e+00> : vector<8x8xf32>
    %57 = tpu.matmul %56, %46, %cst_26 {dimension_numbers = #tpu.dot_dimension_numbers<[1], [0], [0], [1], [0, 0, 1, 1], [], []>} : vector<8x16xbf16>, vector<16x8xbf16>, vector<8x8xf32> -> vector<8x8xf32>
    %58 = tpu.reciprocal %55 {approx = true} : vector<8x1xf32> -> vector<8x1xf32>
    %59 = vector.broadcast %58 : vector<8x1xf32> to vector<8x8xf32>
    %60 = arith.mulf %57, %59 : vector<8x8xf32>
    %61 = arith.truncf %60 : vector<8x8xf32> to vector<8x8xbf16>
    %c0_27 = arith.constant 0 : index
    %c8 = arith.constant 8 : index
    %62 = vector.load %arg16[%c0_27, %c8] : memref<8x32xbf16, #tpu.memory_space<vmem>>, vector<8x8xbf16>
    tpu.vector_store %arg16[%c0_27, %c8], %61 {strides = array<i32>} : memref<8x32xbf16, #tpu.memory_space<vmem>>, vector<8x8xbf16>,
    %63 = vector.extract_strided_slice %11 {offsets = [0, 16], sizes = [8, 8], strides = [1, 1]} : vector<8x32xbf16> to vector<8x8xbf16>
    %64 = vector.extract_strided_slice %18 {offsets = [0, 16], sizes = [16, 8], strides = [1, 1]} : vector<16x32xbf16> to vector<16x8xbf16>
    %65 = vector.extract_strided_slice %20 {offsets = [0, 16], sizes = [16, 8], strides = [1, 1]} : vector<16x32xbf16> to vector<16x8xbf16>
    %cst_28 = arith.constant dense<0.000000e+00> : vector<8x16xf32>
    %66 = tpu.matmul %63, %64, %cst_28 {dimension_numbers = #tpu.dot_dimension_numbers<[1], [1], [0], [0], [0, 0, 1, 0], [], []>} : vector<8x8xbf16>, vector<16x8xbf16>, vector<8x16xf32> -> vector<8x16xf32>
    %67 = arith.addf %66, %24 : vector<8x16xf32>
    %cst_29 = arith.constant dense<0xFF800000> : vector<8xf32>
    %68 = vector.multi_reduction <maximumf>, %67, %cst_29 [1] : vector<8x16xf32> to vector<8xf32>
    %69 = vector.shape_cast %68 : vector<8xf32> to vector<8x1xf32>
    %70 = vector.broadcast %69 : vector<8x1xf32> to vector<8x16xf32>
    %71 = arith.subf %67, %70 : vector<8x16xf32>
    %72 = math.exp %71 : vector<8x16xf32>
    %cst_30 = arith.constant dense<0.000000e+00> : vector<8xf32>
    %73 = vector.multi_reduction <add>, %72, %cst_30 [1] : vector<8x16xf32> to vector<8xf32>
    %74 = vector.shape_cast %73 : vector<8xf32> to vector<8x1xf32>
    %75 = arith.truncf %72 : vector<8x16xf32> to vector<8x16xbf16>
    %cst_31 = arith.constant dense<0.000000e+00> : vector<8x8xf32>
    %76 = tpu.matmul %75, %65, %cst_31 {dimension_numbers = #tpu.dot_dimension_numbers<[1], [0], [0], [1], [0, 0, 1, 1], [], []>} : vector<8x16xbf16>, vector<16x8xbf16>, vector<8x8xf32> -> vector<8x8xf32>
    %77 = tpu.reciprocal %74 {approx = true} : vector<8x1xf32> -> vector<8x1xf32>
    %78 = vector.broadcast %77 : vector<8x1xf32> to vector<8x8xf32>
    %79 = arith.mulf %76, %78 : vector<8x8xf32>
    %80 = arith.truncf %79 : vector<8x8xf32> to vector<8x8xbf16>
    %c0_32 = arith.constant 0 : index
    %c16 = arith.constant 16 : index
    %81 = vector.load %arg16[%c0_32, %c16] : memref<8x32xbf16, #tpu.memory_space<vmem>>, vector<8x8xbf16>
    tpu.vector_store %arg16[%c0_32, %c16], %80 {strides = array<i32>} : memref<8x32xbf16, #tpu.memory_space<vmem>>, vector<8x8xbf16>,
    %82 = vector.extract_strided_slice %11 {offsets = [0, 24], sizes = [8, 8], strides = [1, 1]} : vector<8x32xbf16> to vector<8x8xbf16>
    %83 = vector.extract_strided_slice %18 {offsets = [0, 24], sizes = [16, 8], strides = [1, 1]} : vector<16x32xbf16> to vector<16x8xbf16>
    %84 = vector.extract_strided_slice %20 {offsets = [0, 24], sizes = [16, 8], strides = [1, 1]} : vector<16x32xbf16> to vector<16x8xbf16>
    %cst_33 = arith.constant dense<0.000000e+00> : vector<8x16xf32>
    %85 = tpu.matmul %82, %83, %cst_33 {dimension_numbers = #tpu.dot_dimension_numbers<[1], [1], [0], [0], [0, 0, 1, 0], [], []>} : vector<8x8xbf16>, vector<16x8xbf16>, vector<8x16xf32> -> vector<8x16xf32>
    %86 = arith.addf %85, %24 : vector<8x16xf32>
    %cst_34 = arith.constant dense<0xFF800000> : vector<8xf32>
    %87 = vector.multi_reduction <maximumf>, %86, %cst_34 [1] : vector<8x16xf32> to vector<8xf32>
    %88 = vector.shape_cast %87 : vector<8xf32> to vector<8x1xf32>
    %89 = vector.broadcast %88 : vector<8x1xf32> to vector<8x16xf32>
    %90 = arith.subf %86, %89 : vector<8x16xf32>
    %91 = math.exp %90 : vector<8x16xf32>
    %cst_35 = arith.constant dense<0.000000e+00> : vector<8xf32>
    %92 = vector.multi_reduction <add>, %91, %cst_35 [1] : vector<8x16xf32> to vector<8xf32>
    %93 = vector.shape_cast %92 : vector<8xf32> to vector<8x1xf32>
    %94 = arith.truncf %91 : vector<8x16xf32> to vector<8x16xbf16>
    %cst_36 = arith.constant dense<0.000000e+00> : vector<8x8xf32>
    %95 = tpu.matmul %94, %84, %cst_36 {dimension_numbers = #tpu.dot_dimension_numbers<[1], [0], [0], [1], [0, 0, 1, 1], [], []>} : vector<8x16xbf16>, vector<16x8xbf16>, vector<8x8xf32> -> vector<8x8xf32>
    %96 = tpu.reciprocal %93 {approx = true} : vector<8x1xf32> -> vector<8x1xf32>
    %97 = vector.broadcast %96 : vector<8x1xf32> to vector<8x8xf32>
    %98 = arith.mulf %95, %97 : vector<8x8xf32>
    %99 = arith.truncf %98 : vector<8x8xf32> to vector<8x8xbf16>
    %c0_37 = arith.constant 0 : index
    %c24 = arith.constant 24 : index
    %100 = vector.load %arg16[%c0_37, %c24] : memref<8x32xbf16, #tpu.memory_space<vmem>>, vector<8x8xbf16>
    tpu.vector_store %arg16[%c0_37, %c24], %99 {strides = array<i32>} : memref<8x32xbf16, #tpu.memory_space<vmem>>, vector<8x8xbf16>,
    %c0_38 = arith.constant 0 : index
    %c0_39 = arith.constant 0 : index
    %101 = vector.load %arg16[%c0_38, %c0_39] : memref<8x32xbf16, #tpu.memory_space<vmem>>, vector<8x32xbf16>
    %c0_40 = arith.constant 0 : index
    %c0_41 = arith.constant 0 : index
    %102 = vector.load %arg9[%c0_40, %c0_41] : memref<32x32xbf16, #tpu.memory_space<vmem>>, vector<32x32xbf16>
    %cst_42 = arith.constant dense<0.000000e+00> : vector<8x32xf32>
    %103 = tpu.matmul %101, %102, %cst_42 {dimension_numbers = #tpu.dot_dimension_numbers<[1], [0], [0], [1], [0, 0, 1, 1], [], []>} : vector<8x32xbf16>, vector<32x32xbf16>, vector<8x32xf32> -> vector<8x32xf32>
    %c0_43 = arith.constant 0 : index
    %c0_44 = arith.constant 0 : index
    %104 = vector.load %arg10[%c0_43, %c0_44] : memref<1x32xf32, #tpu.memory_space<vmem>>, vector<1x32xf32>
    %105 = vector.broadcast %104 : vector<1x32xf32> to vector<8x32xf32>
    %106 = arith.addf %103, %105 : vector<8x32xf32>
    %107 = arith.truncf %106 : vector<8x32xf32> to vector<8x32xbf16>
    %c0_45 = arith.constant 0 : index
    %c0_46 = arith.constant 0 : index
    %108 = vector.load %arg11[%c0_45, %c0_46] : memref<32x32xbf16, #tpu.memory_space<vmem>>, vector<32x32xbf16>
    %cst_47 = arith.constant dense<0.000000e+00> : vector<8x32xf32>
    %109 = tpu.matmul %107, %108, %cst_47 {dimension_numbers = #tpu.dot_dimension_numbers<[1], [0], [0], [1], [0, 0, 1, 1], [], []>} : vector<8x32xbf16>, vector<32x32xbf16>, vector<8x32xf32> -> vector<8x32xf32>
    %c0_48 = arith.constant 0 : index
    %c0_49 = arith.constant 0 : index
    %110 = vector.load %arg12[%c0_48, %c0_49] : memref<1x32xf32, #tpu.memory_space<vmem>>, vector<1x32xf32>
    %111 = vector.broadcast %110 : vector<1x32xf32> to vector<8x32xf32>
    %112 = arith.addf %109, %111 : vector<8x32xf32>
    %113 = arith.addf %112, %1 : vector<8x32xf32>
    %cst_50 = arith.constant dense<0.000000e+00> : vector<8xf32>
    %114 = vector.multi_reduction <add>, %113, %cst_50 [1] : vector<8x32xf32> to vector<8xf32>
    %115 = vector.shape_cast %114 : vector<8xf32> to vector<8x1xf32>
    %cst_51 = arith.constant 3.200000e+01 : f32
    %116 = vector.broadcast %cst_51 : f32 to vector<8x1xf32>
    %117 = arith.divf %115, %116 : vector<8x1xf32>
    %118 = vector.broadcast %117 : vector<8x1xf32> to vector<8x32xf32>
    %119 = arith.subf %113, %118 : vector<8x32xf32>
    %120 = arith.mulf %119, %119 : vector<8x32xf32>
    %cst_52 = arith.constant dense<0.000000e+00> : vector<8xf32>
    %121 = vector.multi_reduction <add>, %120, %cst_52 [1] : vector<8x32xf32> to vector<8xf32>
    %122 = vector.shape_cast %121 : vector<8xf32> to vector<8x1xf32>
    %cst_53 = arith.constant 3.200000e+01 : f32
    %123 = vector.broadcast %cst_53 : f32 to vector<8x1xf32>
    %124 = arith.divf %122, %123 : vector<8x1xf32>
    %125 = vector.broadcast %117 : vector<8x1xf32> to vector<8x32xf32>
    %126 = arith.subf %113, %125 : vector<8x32xf32>
    %cst_54 = arith.constant 9.99999996E-13 : f32
    %127 = vector.broadcast %cst_54 : f32 to vector<8x1xf32>
    %128 = arith.addf %124, %127 : vector<8x1xf32>
    %129 = math.rsqrt %128 : vector<8x1xf32>
    %130 = vector.broadcast %129 : vector<8x1xf32> to vector<8x32xf32>
    %131 = arith.mulf %126, %130 : vector<8x32xf32>
    %c0_55 = arith.constant 0 : index
    %c0_56 = arith.constant 0 : index
    %132 = vector.load %arg13[%c0_55, %c0_56] : memref<1x32xf32, #tpu.memory_space<vmem>>, vector<1x32xf32>
    %133 = vector.broadcast %132 : vector<1x32xf32> to vector<8x32xf32>
    %134 = arith.mulf %131, %133 : vector<8x32xf32>
    %c0_57 = arith.constant 0 : index
    %c0_58 = arith.constant 0 : index
    %135 = vector.load %arg14[%c0_57, %c0_58] : memref<1x32xf32, #tpu.memory_space<vmem>>, vector<1x32xf32>
    %136 = vector.broadcast %135 : vector<1x32xf32> to vector<8x32xf32>
    %137 = arith.addf %134, %136 : vector<8x32xf32>
    %138 = arith.addf %106, %137 : vector<8x32xf32>
    %c0_59 = arith.constant 0 : index
    %c0_60 = arith.constant 0 : index
    %c0_61 = arith.constant 0 : index
    %139 = vector.load %arg15[%c0_59, %c0_60, %c0_61] : memref<1x8x32xf32, #tpu.memory_space<vmem>>, vector<1x8x32xf32>
    %140 = vector.shape_cast %139 : vector<1x8x32xf32> to vector<8x32xf32>
    %141 = vector.shape_cast %138 : vector<8x32xf32> to vector<1x8x32xf32>
    tpu.vector_store %arg15[%c0_59, %c0_60, %c0_61], %141 {strides = array<i32>} : memref<1x8x32xf32, #tpu.memory_space<vmem>>, vector<1x8x32xf32>,
    return
  }
  func.func @transform_0(%arg0: i32, %arg1: i32) -> (i32, i32, i32) {
    %c0_i32 = arith.constant 0 : i32
    %c0_i32_0 = arith.constant 0 : i32
    return %arg0, %arg1, %c0_i32 : i32, i32, i32
  }
  func.func @transform_1(%arg0: i32, %arg1: i32) -> (i32, i32, i32) {
    %c0_i32 = arith.constant 0 : i32
    %c0_i32_0 = arith.constant 0 : i32
    %c0_i32_1 = arith.constant 0 : i32
    return %arg0, %c0_i32, %c0_i32_0 : i32, i32, i32
  }
  func.func @transform_2(%arg0: i32, %arg1: i32) -> (i32, i32, i32) {
    %c0_i32 = arith.constant 0 : i32
    %c0_i32_0 = arith.constant 0 : i32
    %c0_i32_1 = arith.constant 0 : i32
    return %arg0, %c0_i32, %c0_i32_0 : i32, i32, i32
  }
  func.func @transform_3(%arg0: i32, %arg1: i32) -> (i32, i32) {
    %c0_i32 = arith.constant 0 : i32
    %c0_i32_0 = arith.constant 0 : i32
    %c0_i32_1 = arith.constant 0 : i32
    return %c0_i32, %c0_i32_0 : i32, i32
  }
  func.func @transform_4(%arg0: i32, %arg1: i32) -> (i32, i32) {
    %c0_i32 = arith.constant 0 : i32
    %c0_i32_0 = arith.constant 0 : i32
    %c0_i32_1 = arith.constant 0 : i32
    return %c0_i32, %c0_i32_0 : i32, i32
  }
  func.func @transform_5(%arg0: i32, %arg1: i32) -> (i32, i32) {
    %c0_i32 = arith.constant 0 : i32
    %c0_i32_0 = arith.constant 0 : i32
    %c0_i32_1 = arith.constant 0 : i32
    return %c0_i32, %c0_i32_0 : i32, i32
  }
  func.func @transform_6(%arg0: i32, %arg1: i32) -> (i32, i32) {
    %c0_i32 = arith.constant 0 : i32
    %c0_i32_0 = arith.constant 0 : i32
    %c0_i32_1 = arith.constant 0 : i32
    return %c0_i32, %c0_i32_0 : i32, i32
  }
  func.func @transform_7(%arg0: i32, %arg1: i32) -> (i32, i32) {
    %c0_i32 = arith.constant 0 : i32
    %c0_i32_0 = arith.constant 0 : i32
    %c0_i32_1 = arith.constant 0 : i32
    return %c0_i32, %c0_i32_0 : i32, i32
  }
  func.func @transform_8(%arg0: i32, %arg1: i32) -> (i32, i32) {
    %c0_i32 = arith.constant 0 : i32
    %c0_i32_0 = arith.constant 0 : i32
    %c0_i32_1 = arith.constant 0 : i32
    return %c0_i32, %c0_i32_0 : i32, i32
  }
  func.func @transform_9(%arg0: i32, %arg1: i32) -> (i32, i32) {
    %c0_i32 = arith.constant 0 : i32
    %c0_i32_0 = arith.constant 0 : i32
    %c0_i32_1 = arith.constant 0 : i32
    return %c0_i32, %c0_i32_0 : i32, i32
  }
  func.func @transform_10(%arg0: i32, %arg1: i32) -> (i32, i32) {
    %c0_i32 = arith.constant 0 : i32
    %c0_i32_0 = arith.constant 0 : i32
    %c0_i32_1 = arith.constant 0 : i32
    return %c0_i32, %c0_i32_0 : i32, i32
  }
  func.func @transform_11(%arg0: i32, %arg1: i32) -> (i32, i32) {
    %c0_i32 = arith.constant 0 : i32
    %c0_i32_0 = arith.constant 0 : i32
    %c0_i32_1 = arith.constant 0 : i32
    return %c0_i32, %c0_i32_0 : i32, i32
  }
  func.func @transform_12(%arg0: i32, %arg1: i32) -> (i32, i32) {
    %c0_i32 = arith.constant 0 : i32
    %c0_i32_0 = arith.constant 0 : i32
    %c0_i32_1 = arith.constant 0 : i32
    return %c0_i32, %c0_i32_0 : i32, i32
  }
  func.func @transform_13(%arg0: i32, %arg1: i32) -> (i32, i32, i32) {
    %c0_i32 = arith.constant 0 : i32
    %c0_i32_0 = arith.constant 0 : i32
    return %arg0, %arg1, %c0_i32 : i32, i32, i32
  }
}

</mosaic_0001>

<llo_original>
// kernel: input_x_attention.1
$region0: #{input_x_attention.1}
  #allocation0 [shape = 'u32[]', space=smem, size = 0x4, offset = 0x4, fixed_abs, tag = 'smem constant byte address 0x4 - core index']
  #allocation1 [shape = 'u32[144,128]{1,0:T(1,128)}', space=vmem, size = 0x12000, scoped, tag = 'internal scratch']
  #allocation2 [shape = 'bf16[8,32]{1,0:T(8,128)(2,1)}', space=vmem, size = 0x800, scoped, tag = 'scratch operand']
  %s0 = inlined_call_operand.hbm [shape: f32[2,8,32], index: 0, kind: input, shape index: {}]
  %s1 = inlined_call_operand.hbm [shape: f32[2,16,32], index: 1, kind: input, shape index: {}]
  %s2 = inlined_call_operand.hbm [shape: f32[2,1,16], index: 2, kind: input, shape index: {}]
  %s3 = inlined_call_operand.hbm [shape: bf16[32,32], index: 3, kind: input, shape index: {}]
  %s4 = inlined_call_operand.hbm [shape: f32[1,32], index: 4, kind: input, shape index: {}]
  %s5 = inlined_call_operand.hbm [shape: bf16[32,64], index: 5, kind: input, shape index: {}]
  %s6 = inlined_call_operand.hbm [shape: f32[1,64], index: 6, kind: input, shape index: {}]
  %s7 = inlined_call_operand.hbm [shape: bf16[32,32], index: 7, kind: input, shape index: {}]
  %s8 = inlined_call_operand.hbm [shape: f32[1,32], index: 8, kind: input, shape index: {}]
  %s9 = inlined_call_operand.hbm [shape: bf16[32,32], index: 9, kind: input, shape index: {}]
  %s10 = inlined_call_operand.hbm [shape: f32[1,32], index: 10, kind: input, shape index: {}]
  %s11 = inlined_call_operand.hbm [shape: f32[1,32], index: 11, kind: input, shape index: {}]
  %s12 = inlined_call_operand.hbm [shape: f32[1,32], index: 12, kind: input, shape index: {}]
  %s13 = inlined_call_operand.hbm [shape: f32[2,8,32], index: 13, kind: output, shape index: {}]
  %s14 = sld [smem:[#allocation0]]
  $region137: #{input_x_attention.1} parent=0
    _
  %s16 = ssub.s32 1, %s14
  %s17 = scalar_select 0, %s16, %s14
  $region1: #{input_x_attention.1} parent=0
    #allocation3 [shape = 'u8[8192]{0}', space=vmem, size = 0x2000, scoped, tag = 'input window, operand 0']
    #allocation4 [shape = 's32[2]{0}', space=sflag, size = 0x8, scoped, tag = 'scoped memory for input_x_attention.1']
    #allocation5 [shape = 's32[2]{0}', space=sflag, size = 0x8, scoped, tag = 'scoped memory for input_x_attention.1']
    #allocation6 [shape = 'u8[16384]{0}', space=vmem, size = 0x4000, scoped, tag = 'input window, operand 1']
    #allocation7 [shape = 's32[2]{0}', space=sflag, size = 0x8, scoped, tag = 'scoped memory for input_x_attention.1']
    #allocation8 [shape = 'u8[1024]{0}', space=vmem, size = 0x400, scoped, tag = 'input window, operand 2']
    #allocation9 [shape = 'u8[8192]{0}', space=vmem, size = 0x2000, scoped, tag = 'input window, operand 3, single buffered']
    #allocation10 [shape = 's32[1]{0}', space=sflag, size = 0x4, scoped, tag = 'scoped memory for input_x_attention.1']
    #allocation11 [shape = 'u8[512]{0}', space=vmem, size = 0x400, scoped, tag = 'input window, operand 4, single buffered']
    #allocation12 [shape = 'u8[8192]{0}', space=vmem, size = 0x2000, scoped, tag = 'input window, operand 5, single buffered']
    #allocation13 [shape = 's32[1]{0}', space=sflag, size = 0x4, scoped, tag = 'scoped memory for input_x_attention.1']
    #allocation14 [shape = 'u8[512]{0}', space=vmem, size = 0x400, scoped, tag = 'input window, operand 6, single buffered']
    #allocation15 [shape = 'u8[8192]{0}', space=vmem, size = 0x2000, scoped, tag = 'input window, operand 7, single buffered']
    #allocation16 [shape = 's32[1]{0}', space=sflag, size = 0x4, scoped, tag = 'scoped memory for input_x_attention.1']
    #allocation17 [shape = 'u8[512]{0}', space=vmem, size = 0x400, scoped, tag = 'input window, operand 8, single buffered']
    #allocation18 [shape = 'u8[8192]{0}', space=vmem, size = 0x2000, scoped, tag = 'input window, operand 9, single buffered']
    #allocation19 [shape = 's32[1]{0}', space=sflag, size = 0x4, scoped, tag = 'scoped memory for input_x_attention.1']
    #allocation20 [shape = 'u8[512]{0}', space=vmem, size = 0x400, scoped, tag = 'input window, operand 10, single buffered']
    #allocation21 [shape = 'u8[512]{0}', space=vmem, size = 0x400, scoped, tag = 'input window, operand 11, single buffered']
    #allocation22 [shape = 's32[1]{0}', space=sflag, size = 0x4, scoped, tag = 'scoped memory for input_x_attention.1']
    #allocation23 [shape = 'u8[512]{0}', space=vmem, size = 0x400, scoped, tag = 'input window, operand 12, single buffered']
    #allocation24 [shape = 'u8[8192]{0}', space=vmem, size = 0x2000, scoped, tag = 'output window, operand 0']
    %18 = vsyncpa [#allocation4], 0
    %s19 = scalar_lea.sflag [#allocation4], 1
    %20 = vsyncpa %s19, 0
    %21 = vsyncpa [#allocation7], 0
    %s22 = scalar_lea.sflag [#allocation7], 1
    %23 = vsyncpa %s22, 0
    %24 = vsyncpa [#allocation10], 0
    %25 = vsyncpa [#allocation13], 0
    %26 = vsyncpa [#allocation16], 0
    %27 = vsyncpa [#allocation19], 0
    %28 = vsyncpa [#allocation22], 0
    %29 = vsyncpa [#allocation5], 0
    %s30 = scalar_lea.sflag [#allocation5], 1
    %31 = vsyncpa %s30, 0
    loop: start=0, step=1, limit=4
    $region2: #{input_x_attention.1} parent=1 // loop_pre_header
      _
    $region3: #{input_x_attention.1} parent=1 // loop_header
      %s33 = sphi 0, %s37
      %p34 = scmp.ge.s32.totalorder %s33, 4
      %s40 = sphi 0, %s52
      %s41 = sphi 0, %s48
      %s42 = sphi 0, %s40
      %s43 = sphi 0, %s41
      %s44 = sphi 0, %s42
      %s45 = sphi 0, %s43
      %s57 = sphi 0, %s59
      %s60 = sphi 0, %s57
      %s61 = sphi 0, %s60
      %s77 = sphi 0, %s61
      %s83 = sphi 0, %s85
      %s86 = sphi 0, %s83
      %s87 = sphi 0, %s86
      %s103 = sphi 0, %s87
      %s109 = sphi 0, %s111
      %s112 = sphi 0, %s109
      %s113 = sphi 0, %s112
      %s129 = sphi 0, %s113
      %s133 = sphi 0, %s133
      %s135 = sphi 0, %s133
      %s136 = sphi 0, %s135
      %s150 = sphi 0, %s136
      %s154 = sphi 0, %s154
      %s156 = sphi 0, %s154
      %s157 = sphi 0, %s156
      %s171 = sphi 0, %s157
      %s175 = sphi 0, %s175
      %s177 = sphi 0, %s175
      %s178 = sphi 0, %s177
      %s192 = sphi 0, %s178
      %s196 = sphi 0, %s196
      %s198 = sphi 0, %s196
      %s199 = sphi 0, %s198
      %s213 = sphi 0, %s199
      %s217 = sphi 0, %s217
      %s219 = sphi 0, %s217
      %s220 = sphi 0, %s219
      %s234 = sphi 0, %s220
      %s238 = sphi 0, %s238
      %s240 = sphi 0, %s238
      %s241 = sphi 0, %s240
      %s255 = sphi 0, %s241
      %s259 = sphi 0, %s259
      %s261 = sphi 0, %s259
      %s262 = sphi 0, %s261
      %s276 = sphi 0, %s262
      %s280 = sphi 0, %s280
      %s282 = sphi 0, %s280
      %s283 = sphi 0, %s282
      %s297 = sphi 0, %s283
      %s301 = sphi 0, %s301
      %s303 = sphi 0, %s301
      %s304 = sphi 0, %s303
      %s318 = sphi 0, %s304
      %s322 = sphi 0, %s322
      %s324 = sphi 0, %s322
      %s325 = sphi 0, %s324
      %s339 = sphi 0, %s325
      %s347 = sphi 0, %s349
      %s350 = sphi 0, %s347
      %s351 = sphi 0, %s350
      %s367 = sphi 0, %s351
    $region4: #{input_x_attention.1} parent=1 // loop_header_branch
      %36 = sbr.rel (%p34) target = $region8
    $region5: #{input_x_attention.1} parent=1 // loop_body
      %s38 = ssub.s32 %s33, 1
      %s39 = ssub.s32 %s33, 2
      %s46 = sadd.s32 1, %s41
      %p47 = scmp.ge.s32.totalorder %s46, 1
      %s48 = scalar_select %p47, 0, %s46
      %s49 = sadd.s32 1, %s40
      %s50 = scalar_select %p47, %s49, %s40
      %p51 = scmp.ge.s32.totalorder %s50, 2
      %s52 = scalar_select %p51, 0, %s50
      %s53 = ssub.s32 %s40, %s52
      %s54 = ssub.s32 %s41, %s48
      %s55 = sor.u32 %s53, %s54
      %p56 = scmp.eq.s32.totalorder %s55, 0
      %s58 = sadd.s32 %s57, 1
      %s59 = scalar_select %p56, %s57, %s58
      %p62 = pneg %p56
      %p63 = scmp.eq.s32.totalorder %s33, 1
      %p64 = por %p62, %p63
      %p65 = scmp.ne.s32.totalorder %s57, %s60
      %p66 = scmp.eq.s32.totalorder %s33, 0
      %p67 = por %p65, %p66
      %p68 = scmp.ne.s32.totalorder %s57, %s60
      %p69 = scmp.eq.s32.totalorder %s38, 1
      %p70 = por %p68, %p69
      %p71 = scmp.ne.s32.totalorder %s60, %s61
      %p72 = scmp.eq.s32.totalorder %s38, 0
      %p73 = por %p71, %p72
      %p74 = scmp.ne.s32.totalorder %s60, %s61
      %p75 = scmp.eq.s32.totalorder %s39, 1
      %p76 = por %p74, %p75
      %p78 = scmp.ne.s32.totalorder %s61, %s77
      %p79 = scmp.eq.s32.totalorder %s39, 0
      %p80 = por %p78, %p79
      %s81 = ssub.s32 %s40, %s52
      %p82 = scmp.eq.s32.totalorder %s81, 0
      %s84 = sadd.s32 %s83, 1
      %s85 = scalar_select %p82, %s83, %s84
      %p88 = pneg %p82
      %p89 = scmp.eq.s32.totalorder %s33, 1
      %p90 = por %p88, %p89
      %p91 = scmp.ne.s32.totalorder %s83, %s86
      %p92 = scmp.eq.s32.totalorder %s33, 0
      %p93 = por %p91, %p92
      %p94 = scmp.ne.s32.totalorder %s83, %s86
      %p95 = scmp.eq.s32.totalorder %s38, 1
      %p96 = por %p94, %p95
      %p97 = scmp.ne.s32.totalorder %s86, %s87
      %p98 = scmp.eq.s32.totalorder %s38, 0
      %p99 = por %p97, %p98
      %p100 = scmp.ne.s32.totalorder %s86, %s87
      %p101 = scmp.eq.s32.totalorder %s39, 1
      %p102 = por %p100, %p101
      %p104 = scmp.ne.s32.totalorder %s87, %s103
      %p105 = scmp.eq.s32.totalorder %s39, 0
      %p106 = por %p104, %p105
      %s107 = ssub.s32 %s40, %s52
      %p108 = scmp.eq.s32.totalorder %s107, 0
      %s110 = sadd.s32 %s109, 1
      %s111 = scalar_select %p108, %s109, %s110
      %p114 = pneg %p108
      %p115 = scmp.eq.s32.totalorder %s33, 1
      %p116 = por %p114, %p115
      %p117 = scmp.ne.s32.totalorder %s109, %s112
      %p118 = scmp.eq.s32.totalorder %s33, 0
      %p119 = por %p117, %p118
      %p120 = scmp.ne.s32.totalorder %s109, %s112
      %p121 = scmp.eq.s32.totalorder %s38, 1
      %p122 = por %p120, %p121
      %p123 = scmp.ne.s32.totalorder %s112, %s113
      %p124 = scmp.eq.s32.totalorder %s38, 0
      %p125 = por %p123, %p124
      %p126 = scmp.ne.s32.totalorder %s112, %s113
      %p127 = scmp.eq.s32.totalorder %s39, 1
      %p128 = por %p126, %p127
      %p130 = scmp.ne.s32.totalorder %s113, %s129
      %p131 = scmp.eq.s32.totalorder %s39, 0
      %p132 = por %p130, %p131
      %s134 = sadd.s32 %s133, 1
      %p137 = scmp.eq.s32.totalorder %s33, 1
      %p138 = scmp.ne.s32.totalorder %s133, %s135
      %p139 = scmp.eq.s32.totalorder %s33, 0
      %p140 = por %p138, %p139
      %p141 = scmp.ne.s32.totalorder %s133, %s135
      %p142 = scmp.eq.s32.totalorder %s38, 1
      %p143 = por %p141, %p142
      %p144 = scmp.ne.s32.totalorder %s135, %s136
      %p145 = scmp.eq.s32.totalorder %s38, 0
      %p146 = por %p144, %p145
      %p147 = scmp.ne.s32.totalorder %s135, %s136
      %p148 = scmp.eq.s32.totalorder %s39, 1
      %p149 = por %p147, %p148
      %p151 = scmp.ne.s32.totalorder %s136, %s150
      %p152 = scmp.eq.s32.totalorder %s39, 0
      %p153 = por %p151, %p152
      %s155 = sadd.s32 %s154, 1
      %p158 = scmp.eq.s32.totalorder %s33, 1
      %p159 = scmp.ne.s32.totalorder %s154, %s156
      %p160 = scmp.eq.s32.totalorder %s33, 0
      %p161 = por %p159, %p160
      %p162 = scmp.ne.s32.totalorder %s154, %s156
      %p163 = scmp.eq.s32.totalorder %s38, 1
      %p164 = por %p162, %p163
      %p165 = scmp.ne.s32.totalorder %s156, %s157
      %p166 = scmp.eq.s32.totalorder %s38, 0
      %p167 = por %p165, %p166
      %p168 = scmp.ne.s32.totalorder %s156, %s157
      %p169 = scmp.eq.s32.totalorder %s39, 1
      %p170 = por %p168, %p169
      %p172 = scmp.ne.s32.totalorder %s157, %s171
      %p173 = scmp.eq.s32.totalorder %s39, 0
      %p174 = por %p172, %p173
      %s176 = sadd.s32 %s175, 1
      %p179 = scmp.eq.s32.totalorder %s33, 1
      %p180 = scmp.ne.s32.totalorder %s175, %s177
      %p181 = scmp.eq.s32.totalorder %s33, 0
      %p182 = por %p180, %p181
      %p183 = scmp.ne.s32.totalorder %s175, %s177
      %p184 = scmp.eq.s32.totalorder %s38, 1
      %p185 = por %p183, %p184
      %p186 = scmp.ne.s32.totalorder %s177, %s178
      %p187 = scmp.eq.s32.totalorder %s38, 0
      %p188 = por %p186, %p187
      %p189 = scmp.ne.s32.totalorder %s177, %s178
      %p190 = scmp.eq.s32.totalorder %s39, 1
      %p191 = por %p189, %p190
      %p193 = scmp.ne.s32.totalorder %s178, %s192
      %p194 = scmp.eq.s32.totalorder %s39, 0
      %p195 = por %p193, %p194
      %s197 = sadd.s32 %s196, 1
      %p200 = scmp.eq.s32.totalorder %s33, 1
      %p201 = scmp.ne.s32.totalorder %s196, %s198
      %p202 = scmp.eq.s32.totalorder %s33, 0
      %p203 = por %p201, %p202
      %p204 = scmp.ne.s32.totalorder %s196, %s198
      %p205 = scmp.eq.s32.totalorder %s38, 1
      %p206 = por %p204, %p205
      %p207 = scmp.ne.s32.totalorder %s198, %s199
      %p208 = scmp.eq.s32.totalorder %s38, 0
      %p209 = por %p207, %p208
      %p210 = scmp.ne.s32.totalorder %s198, %s199
      %p211 = scmp.eq.s32.totalorder %s39, 1
      %p212 = por %p210, %p211
      %p214 = scmp.ne.s32.totalorder %s199, %s213
      %p215 = scmp.eq.s32.totalorder %s39, 0
      %p216 = por %p214, %p215
      %s218 = sadd.s32 %s217, 1
      %p221 = scmp.eq.s32.totalorder %s33, 1
      %p222 = scmp.ne.s32.totalorder %s217, %s219
      %p223 = scmp.eq.s32.totalorder %s33, 0
      %p224 = por %p222, %p223
      %p225 = scmp.ne.s32.totalorder %s217, %s219
      %p226 = scmp.eq.s32.totalorder %s38, 1
      %p227 = por %p225, %p226
      %p228 = scmp.ne.s32.totalorder %s219, %s220
      %p229 = scmp.eq.s32.totalorder %s38, 0
      %p230 = por %p228, %p229
      %p231 = scmp.ne.s32.totalorder %s219, %s220
      %p232 = scmp.eq.s32.totalorder %s39, 1
      %p233 = por %p231, %p232
      %p235 = scmp.ne.s32.totalorder %s220, %s234
      %p236 = scmp.eq.s32.totalorder %s39, 0
      %p237 = por %p235, %p236
      %s239 = sadd.s32 %s238, 1
      %p242 = scmp.eq.s32.totalorder %s33, 1
      %p243 = scmp.ne.s32.totalorder %s238, %s240
      %p244 = scmp.eq.s32.totalorder %s33, 0
      %p245 = por %p243, %p244
      %p246 = scmp.ne.s32.totalorder %s238, %s240
      %p247 = scmp.eq.s32.totalorder %s38, 1
      %p248 = por %p246, %p247
      %p249 = scmp.ne.s32.totalorder %s240, %s241
      %p250 = scmp.eq.s32.totalorder %s38, 0
      %p251 = por %p249, %p250
      %p252 = scmp.ne.s32.totalorder %s240, %s241
      %p253 = scmp.eq.s32.totalorder %s39, 1
      %p254 = por %p252, %p253
      %p256 = scmp.ne.s32.totalorder %s241, %s255
      %p257 = scmp.eq.s32.totalorder %s39, 0
      %p258 = por %p256, %p257
      %s260 = sadd.s32 %s259, 1
      %p263 = scmp.eq.s32.totalorder %s33, 1
      %p264 = scmp.ne.s32.totalorder %s259, %s261
      %p265 = scmp.eq.s32.totalorder %s33, 0
      %p266 = por %p264, %p265
      %p267 = scmp.ne.s32.totalorder %s259, %s261
      %p268 = scmp.eq.s32.totalorder %s38, 1
      %p269 = por %p267, %p268
      %p270 = scmp.ne.s32.totalorder %s261, %s262
      %p271 = scmp.eq.s32.totalorder %s38, 0
      %p272 = por %p270, %p271
      %p273 = scmp.ne.s32.totalorder %s261, %s262
      %p274 = scmp.eq.s32.totalorder %s39, 1
      %p275 = por %p273, %p274
      %p277 = scmp.ne.s32.totalorder %s262, %s276
      %p278 = scmp.eq.s32.totalorder %s39, 0
      %p279 = por %p277, %p278
      %s281 = sadd.s32 %s280, 1
      %p284 = scmp.eq.s32.totalorder %s33, 1
      %p285 = scmp.ne.s32.totalorder %s280, %s282
      %p286 = scmp.eq.s32.totalorder %s33, 0
      %p287 = por %p285, %p286
      %p288 = scmp.ne.s32.totalorder %s280, %s282
      %p289 = scmp.eq.s32.totalorder %s38, 1
      %p290 = por %p288, %p289
      %p291 = scmp.ne.s32.totalorder %s282, %s283
      %p292 = scmp.eq.s32.totalorder %s38, 0
      %p293 = por %p291, %p292
      %p294 = scmp.ne.s32.totalorder %s282, %s283
      %p295 = scmp.eq.s32.totalorder %s39, 1
      %p296 = por %p294, %p295
      %p298 = scmp.ne.s32.totalorder %s283, %s297
      %p299 = scmp.eq.s32.totalorder %s39, 0
      %p300 = por %p298, %p299
      %s302 = sadd.s32 %s301, 1
      %p305 = scmp.eq.s32.totalorder %s33, 1
      %p306 = scmp.ne.s32.totalorder %s301, %s303
      %p307 = scmp.eq.s32.totalorder %s33, 0
      %p308 = por %p306, %p307
      %p309 = scmp.ne.s32.totalorder %s301, %s303
      %p310 = scmp.eq.s32.totalorder %s38, 1
      %p311 = por %p309, %p310
      %p312 = scmp.ne.s32.totalorder %s303, %s304
      %p313 = scmp.eq.s32.totalorder %s38, 0
      %p314 = por %p312, %p313
      %p315 = scmp.ne.s32.totalorder %s303, %s304
      %p316 = scmp.eq.s32.totalorder %s39, 1
      %p317 = por %p315, %p316
      %p319 = scmp.ne.s32.totalorder %s304, %s318
      %p320 = scmp.eq.s32.totalorder %s39, 0
      %p321 = por %p319, %p320
      %s323 = sadd.s32 %s322, 1
      %p326 = scmp.eq.s32.totalorder %s33, 1
      %p327 = scmp.ne.s32.totalorder %s322, %s324
      %p328 = scmp.eq.s32.totalorder %s33, 0
      %p329 = por %p327, %p328
      %p330 = scmp.ne.s32.totalorder %s322, %s324
      %p331 = scmp.eq.s32.totalorder %s38, 1
      %p332 = por %p330, %p331
      %p333 = scmp.ne.s32.totalorder %s324, %s325
      %p334 = scmp.eq.s32.totalorder %s38, 0
      %p335 = por %p333, %p334
      %p336 = scmp.ne.s32.totalorder %s324, %s325
      %p337 = scmp.eq.s32.totalorder %s39, 1
      %p338 = por %p336, %p337
      %p340 = scmp.ne.s32.totalorder %s325, %s339
      %p341 = scmp.eq.s32.totalorder %s39, 0
      %p342 = por %p340, %p341
      %s343 = ssub.s32 %s40, %s52
      %s344 = ssub.s32 %s41, %s48
      %s345 = sor.u32 %s343, %s344
      %p346 = scmp.eq.s32.totalorder %s345, 0
      %s348 = sadd.s32 %s347, 1
      %s349 = scalar_select %p346, %s347, %s348
      %p352 = pneg %p346
      %p353 = scmp.eq.s32.totalorder %s33, 1
      %p354 = por %p352, %p353
      %p355 = scmp.ne.s32.totalorder %s347, %s350
      %p356 = scmp.eq.s32.totalorder %s33, 0
      %p357 = por %p355, %p356
      %p358 = scmp.ne.s32.totalorder %s347, %s350
      %p359 = scmp.eq.s32.totalorder %s38, 1
      %p360 = por %p358, %p359
      %p361 = scmp.ne.s32.totalorder %s350, %s351
      %p362 = scmp.eq.s32.totalorder %s38, 0
      %p363 = por %p361, %p362
      %p364 = scmp.ne.s32.totalorder %s350, %s351
      %p365 = scmp.eq.s32.totalorder %s39, 1
      %p366 = por %p364, %p365
      %p368 = scmp.ne.s32.totalorder %s351, %s367
      %p369 = scmp.eq.s32.totalorder %s39, 0
      %p370 = por %p368, %p369
      %p371 = scmp.le.s32.totalorder 1, %s33
      %p372 = scmp.lt.s32.totalorder %s33, 3
      %p373 = pnand %p371, %p372
      %p374 = pneg %p373
      // Predicated region
      $region9: #{input_x_attention.1} parent=5 // pred_check
        _
      $region10: #{input_x_attention.1} parent=5 // pred_check_branch
        %376 = sbr.rel (%p373) target = $region12
      $region11: #{input_x_attention.1} parent=5 // pred_region
        %s377 = ssub.s32 %s33, 1
        // Predicated region
        $region13: #{input_x_attention.1} parent=11 // pred_check
          %p378 = pneg %p146
        $region14: #{input_x_attention.1} parent=11 // pred_check_branch
          %380 = sbr.rel (%p378) target = $region16
        $region15: #{input_x_attention.1} parent=11 // pred_region
          %s382 = ssub.s32 256, 256
          %383 = vsyncadd [#allocation10], %s382
          %s384 = sshll.u32 [#allocation9], 4
          %s385 = int_to_ptr.vmem [resolvable:$true] %s384
          %390 = dma.hbm_to_vmem [thread:$0]  %s3, 256, %s385, [#allocation10], 64, 64, 4
        $region16: #{input_x_attention.1} parent=11 // pred_fallthru
          _
        // Predicated region
        $region17: #{input_x_attention.1} parent=11 // pred_check
          %p391 = pneg %p167
        $region18: #{input_x_attention.1} parent=11 // pred_check_branch
          %393 = sbr.rel (%p391) target = $region20
        $region19: #{input_x_attention.1} parent=11 // pred_region
          %s395 = ssub.s32 16, 16
          %396 = vsyncadd [#allocation10], %s395
          %s398 = sshll.u32 [#allocation11], 4
          %s399 = int_to_ptr.vmem [resolvable:$true] %s398
          %401 = dma.hbm_to_vmem [thread:$0]  %s4, 16, %s399, [#allocation10]
        $region20: #{input_x_attention.1} parent=11 // pred_fallthru
          _
        // Predicated region
        $region21: #{input_x_attention.1} parent=11 // pred_check
          %p402 = pneg %p188
        $region22: #{input_x_attention.1} parent=11 // pred_check_branch
          %404 = sbr.rel (%p402) target = $region24
        $region23: #{input_x_attention.1} parent=11 // pred_region
          %s406 = ssub.s32 256, 256
          %407 = vsyncadd [#allocation13], %s406
          %s408 = sshll.u32 [#allocation12], 4
          %s409 = int_to_ptr.vmem [resolvable:$true] %s408
          %414 = dma.hbm_to_vmem [thread:$0]  %s5, 256, %s409, [#allocation13], 64, 64, 4
        $region24: #{input_x_attention.1} parent=11 // pred_fallthru
          _
        // Predicated region
        $region25: #{input_x_attention.1} parent=11 // pred_check
          %p415 = pneg %p209
        $region26: #{input_x_attention.1} parent=11 // pred_check_branch
          %417 = sbr.rel (%p415) target = $region28
        $region27: #{input_x_attention.1} parent=11 // pred_region
          %s419 = ssub.s32 16, 16
          %420 = vsyncadd [#allocation13], %s419
          %s422 = sshll.u32 [#allocation14], 4
          %s423 = int_to_ptr.vmem [resolvable:$true] %s422
          %425 = dma.hbm_to_vmem [thread:$0]  %s6, 16, %s423, [#allocation13]
        $region28: #{input_x_attention.1} parent=11 // pred_fallthru
          _
        // Predicated region
        $region29: #{input_x_attention.1} parent=11 // pred_check
          %p426 = pneg %p230
        $region30: #{input_x_attention.1} parent=11 // pred_check_branch
          %428 = sbr.rel (%p426) target = $region32
        $region31: #{input_x_attention.1} parent=11 // pred_region
          %s430 = ssub.s32 256, 256
          %431 = vsyncadd [#allocation16], %s430
          %s432 = sshll.u32 [#allocation15], 4
          %s433 = int_to_ptr.vmem [resolvable:$true] %s432
          %438 = dma.hbm_to_vmem [thread:$0]  %s7, 256, %s433, [#allocation16], 64, 64, 4
        $region32: #{input_x_attention.1} parent=11 // pred_fallthru
          _
        // Predicated region
        $region33: #{input_x_attention.1} parent=11 // pred_check
          %p439 = pneg %p251
        $region34: #{input_x_attention.1} parent=11 // pred_check_branch
          %441 = sbr.rel (%p439) target = $region36
        $region35: #{input_x_attention.1} parent=11 // pred_region
          %s443 = ssub.s32 16, 16
          %444 = vsyncadd [#allocation16], %s443
          %s446 = sshll.u32 [#allocation17], 4
          %s447 = int_to_ptr.vmem [resolvable:$true] %s446
          %449 = dma.hbm_to_vmem [thread:$0]  %s8, 16, %s447, [#allocation16]
        $region36: #{input_x_attention.1} parent=11 // pred_fallthru
          _
        // Predicated region
        $region37: #{input_x_attention.1} parent=11 // pred_check
          %p450 = pneg %p272
        $region38: #{input_x_attention.1} parent=11 // pred_check_branch
          %452 = sbr.rel (%p450) target = $region40
        $region39: #{input_x_attention.1} parent=11 // pred_region
          %s454 = ssub.s32 256, 256
          %455 = vsyncadd [#allocation19], %s454
          %s456 = sshll.u32 [#allocation18], 4
          %s457 = int_to_ptr.vmem [resolvable:$true] %s456
          %462 = dma.hbm_to_vmem [thread:$0]  %s9, 256, %s457, [#allocation19], 64, 64, 4
        $region40: #{input_x_attention.1} parent=11 // pred_fallthru
          _
        // Predicated region
        $region41: #{input_x_attention.1} parent=11 // pred_check
          %p463 = pneg %p293
        $region42: #{input_x_attention.1} parent=11 // pred_check_branch
          %465 = sbr.rel (%p463) target = $region44
        $region43: #{input_x_attention.1} parent=11 // pred_region
          %s467 = ssub.s32 16, 16
          %468 = vsyncadd [#allocation19], %s467
          %s470 = sshll.u32 [#allocation20], 4
          %s471 = int_to_ptr.vmem [resolvable:$true] %s470
          %473 = dma.hbm_to_vmem [thread:$0]  %s10, 16, %s471, [#allocation19]
        $region44: #{input_x_attention.1} parent=11 // pred_fallthru
          _
        // Predicated region
        $region45: #{input_x_attention.1} parent=11 // pred_check
          %p474 = pneg %p314
        $region46: #{input_x_attention.1} parent=11 // pred_check_branch
          %476 = sbr.rel (%p474) target = $region48
        $region47: #{input_x_attention.1} parent=11 // pred_region
          %s478 = ssub.s32 16, 16
          %479 = vsyncadd [#allocation22], %s478
          %s481 = sshll.u32 [#allocation21], 4
          %s482 = int_to_ptr.vmem [resolvable:$true] %s481
          %484 = dma.hbm_to_vmem [thread:$0]  %s11, 16, %s482, [#allocation22]
        $region48: #{input_x_attention.1} parent=11 // pred_fallthru
          _
        // Predicated region
        $region49: #{input_x_attention.1} parent=11 // pred_check
          %p485 = pneg %p335
        $region50: #{input_x_attention.1} parent=11 // pred_check_branch
          %487 = sbr.rel (%p485) target = $region52
        $region51: #{input_x_attention.1} parent=11 // pred_region
          %s489 = ssub.s32 16, 16
          %490 = vsyncadd [#allocation22], %s489
          %s492 = sshll.u32 [#allocation23], 4
          %s493 = int_to_ptr.vmem [resolvable:$true] %s492
          %495 = dma.hbm_to_vmem [thread:$0]  %s12, 16, %s493, [#allocation22]
        $region52: #{input_x_attention.1} parent=11 // pred_fallthru
          _
      $region12: #{input_x_attention.1} parent=5 // pred_fallthru
        _
      %p496 = scmp.lt.s32.totalorder %s33, 2
      // Predicated region
      $region53: #{input_x_attention.1} parent=5 // pred_check
        %p497 = pneg %p496
      $region54: #{input_x_attention.1} parent=5 // pred_check_branch
        %499 = sbr.rel (%p497) target = $region56
      $region55: #{input_x_attention.1} parent=5 // pred_region
        // Predicated region
        $region57: #{input_x_attention.1} parent=55 // pred_check
          %p500 = pneg %p67
        $region58: #{input_x_attention.1} parent=55 // pred_check_branch
          %502 = sbr.rel (%p500) target = $region60
        $region59: #{input_x_attention.1} parent=55 // pred_region
          %s503 = sand.u32 %s57, 1
          %s504 = scalar_lea.sflag [#allocation4], %s503
          %s505 = sand.u32 %s57, 1
          %s506 = smul.addr %s505, 8
          %s507 = scalar_lea.vmem [#allocation3], %s506
          %s509 = ssub.s32 128, 128
          %510 = vsyncadd %s504, %s509
          %s511 = sadd.s32 %s41, %s40
          %s512 = smul.addr %s511, 128
          %s513 = scalar_lea.hbm %s0, %s512
          %s515 = sshll.u32 %s507, 4
          %s516 = int_to_ptr.vmem [resolvable:$true] %s515
          %518 = dma.hbm_to_vmem [thread:$0]  %s513, 128, %s516, %s504
        $region60: #{input_x_attention.1} parent=55 // pred_fallthru
          _
        // Predicated region
        $region61: #{input_x_attention.1} parent=55 // pred_check
          %p519 = pneg %p93
        $region62: #{input_x_attention.1} parent=55 // pred_check_branch
          %521 = sbr.rel (%p519) target = $region64
        $region63: #{input_x_attention.1} parent=55 // pred_region
          %s522 = sand.u32 %s33, 1
          %s523 = scalar_lea.sflag [#allocation7], %s522
          %s524 = sand.u32 %s83, 1
          %s525 = smul.addr %s524, 16
          %s526 = scalar_lea.vmem [#allocation6], %s525
          %s528 = ssub.s32 256, 256
          %529 = vsyncadd %s523, %s528
          %s530 = smul.addr %s40, 2
          %s531 = smul.addr %s530, 128
          %s532 = scalar_lea.hbm %s1, %s531
          %s533 = sshll.u32 %s526, 4
          %s534 = int_to_ptr.vmem [resolvable:$true] %s533
          %539 = dma.hbm_to_vmem [thread:$0]  %s532, 256, %s534, %s523, 128, 128, 8
        $region64: #{input_x_attention.1} parent=55 // pred_fallthru
          _
        // Predicated region
        $region65: #{input_x_attention.1} parent=55 // pred_check
          %p540 = pneg %p119
        $region66: #{input_x_attention.1} parent=55 // pred_check_branch
          %542 = sbr.rel (%p540) target = $region68
        $region67: #{input_x_attention.1} parent=55 // pred_region
          %s543 = sand.u32 %s33, 1
          %s544 = scalar_lea.sflag [#allocation7], %s543
          %s545 = sand.u32 %s109, 1
          %s546 = scalar_lea.vmem [#allocation8], %s545
          %s548 = ssub.s32 16, 16
          %549 = vsyncadd %s544, %s548
          %s550 = smul.addr %s40, 16
          %s551 = scalar_lea.hbm %s2, %s550
          %s553 = sshll.u32 %s546, 4
          %s554 = int_to_ptr.vmem [resolvable:$true] %s553
          %556 = dma.hbm_to_vmem [thread:$0]  %s551, 16, %s554, %s544
        $region68: #{input_x_attention.1} parent=55 // pred_fallthru
          _
      $region56: #{input_x_attention.1} parent=5 // pred_fallthru
        _
      %p557 = scmp.le.s32.totalorder 1, %s33
      %p558 = scmp.lt.s32.totalorder %s33, 3
      %p559 = pnand %p557, %p558
      %p560 = pneg %p559
      // Predicated region
      $region69: #{input_x_attention.1} parent=5 // pred_check
        _
      $region70: #{input_x_attention.1} parent=5 // pred_check_branch
        %562 = sbr.rel (%p559) target = $region72
      $region71: #{input_x_attention.1} parent=5 // pred_region
        %s563 = ssub.s32 %s33, 1
        %s564 = sand.u32 %s60, 1
        %s565 = scalar_lea.sflag [#allocation4], %s564
        %s566 = sand.u32 %s60, 1
        %s567 = smul.addr %s566, 8
        %s568 = scalar_lea.vmem [#allocation3], %s567
        // Predicated region
        $region73: #{input_x_attention.1} parent=71 // pred_check
          %p569 = pneg %p73
        $region74: #{input_x_attention.1} parent=71 // pred_check_branch
          %571 = sbr.rel (%p569) target = $region76
        $region75: #{input_x_attention.1} parent=71 // pred_region
          %572 = dma.done %s565, 128
        $region76: #{input_x_attention.1} parent=71 // pred_fallthru
          _
        %s573 = sand.u32 %s38, 1
        %s574 = scalar_lea.sflag [#allocation7], %s573
        %s575 = sand.u32 %s86, 1
        %s576 = smul.addr %s575, 16
        %s577 = scalar_lea.vmem [#allocation6], %s576
        // Predicated region
        $region77: #{input_x_attention.1} parent=71 // pred_check
          %p578 = pneg %p99
        $region78: #{input_x_attention.1} parent=71 // pred_check_branch
          %580 = sbr.rel (%p578) target = $region80
        $region79: #{input_x_attention.1} parent=71 // pred_region
          %581 = dma.done %s574, 256
        $region80: #{input_x_attention.1} parent=71 // pred_fallthru
          _
        %s582 = sand.u32 %s38, 1
        %s583 = scalar_lea.sflag [#allocation7], %s582
        %s584 = sand.u32 %s112, 1
        %s585 = scalar_lea.vmem [#allocation8], %s584
        // Predicated region
        $region81: #{input_x_attention.1} parent=71 // pred_check
          %p586 = pneg %p125
        $region82: #{input_x_attention.1} parent=71 // pred_check_branch
          %588 = sbr.rel (%p586) target = $region84
        $region83: #{input_x_attention.1} parent=71 // pred_region
          %589 = dma.done %s583, 16
        $region84: #{input_x_attention.1} parent=71 // pred_fallthru
          _
        // Predicated region
        $region85: #{input_x_attention.1} parent=71 // pred_check
          %p590 = pneg %p146
        $region86: #{input_x_attention.1} parent=71 // pred_check_branch
          %592 = sbr.rel (%p590) target = $region88
        $region87: #{input_x_attention.1} parent=71 // pred_region
          %593 = dma.done [#allocation10], 256
        $region88: #{input_x_attention.1} parent=71 // pred_fallthru
          _
        // Predicated region
        $region89: #{input_x_attention.1} parent=71 // pred_check
          %p594 = pneg %p167
        $region90: #{input_x_attention.1} parent=71 // pred_check_branch
          %596 = sbr.rel (%p594) target = $region92
        $region91: #{input_x_attention.1} parent=71 // pred_region
          %597 = dma.done [#allocation10], 16
        $region92: #{input_x_attention.1} parent=71 // pred_fallthru
          _
        // Predicated region
        $region93: #{input_x_attention.1} parent=71 // pred_check
          %p598 = pneg %p188
        $region94: #{input_x_attention.1} parent=71 // pred_check_branch
          %600 = sbr.rel (%p598) target = $region96
        $region95: #{input_x_attention.1} parent=71 // pred_region
          %601 = dma.done [#allocation13], 256
        $region96: #{input_x_attention.1} parent=71 // pred_fallthru
          _
        // Predicated region
        $region97: #{input_x_attention.1} parent=71 // pred_check
          %p602 = pneg %p209
        $region98: #{input_x_attention.1} parent=71 // pred_check_branch
          %604 = sbr.rel (%p602) target = $region100
        $region99: #{input_x_attention.1} parent=71 // pred_region
          %605 = dma.done [#allocation13], 16
        $region100: #{input_x_attention.1} parent=71 // pred_fallthru
          _
        // Predicated region
        $region101: #{input_x_attention.1} parent=71 // pred_check
          %p606 = pneg %p230
        $region102: #{input_x_attention.1} parent=71 // pred_check_branch
          %608 = sbr.rel (%p606) target = $region104
        $region103: #{input_x_attention.1} parent=71 // pred_region
          %609 = dma.done [#allocation16], 256
        $region104: #{input_x_attention.1} parent=71 // pred_fallthru
          _
        // Predicated region
        $region105: #{input_x_attention.1} parent=71 // pred_check
          %p610 = pneg %p251
        $region106: #{input_x_attention.1} parent=71 // pred_check_branch
          %612 = sbr.rel (%p610) target = $region108
        $region107: #{input_x_attention.1} parent=71 // pred_region
          %613 = dma.done [#allocation16], 16
        $region108: #{input_x_attention.1} parent=71 // pred_fallthru
          _
        // Predicated region
        $region109: #{input_x_attention.1} parent=71 // pred_check
          %p614 = pneg %p272
        $region110: #{input_x_attention.1} parent=71 // pred_check_branch
          %616 = sbr.rel (%p614) target = $region112
        $region111: #{input_x_attention.1} parent=71 // pred_region
          %617 = dma.done [#allocation19], 256
        $region112: #{input_x_attention.1} parent=71 // pred_fallthru
          _
        // Predicated region
        $region113: #{input_x_attention.1} parent=71 // pred_check
          %p618 = pneg %p293
        $region114: #{input_x_attention.1} parent=71 // pred_check_branch
          %620 = sbr.rel (%p618) target = $region116
        $region115: #{input_x_attention.1} parent=71 // pred_region
          %621 = dma.done [#allocation19], 16
        $region116: #{input_x_attention.1} parent=71 // pred_fallthru
          _
        // Predicated region
        $region117: #{input_x_attention.1} parent=71 // pred_check
          %p622 = pneg %p314
        $region118: #{input_x_attention.1} parent=71 // pred_check_branch
          %624 = sbr.rel (%p622) target = $region120
        $region119: #{input_x_attention.1} parent=71 // pred_region
          %625 = dma.done [#allocation22], 16
        $region120: #{input_x_attention.1} parent=71 // pred_fallthru
          _
        // Predicated region
        $region121: #{input_x_attention.1} parent=71 // pred_check
          %p626 = pneg %p335
        $region122: #{input_x_attention.1} parent=71 // pred_check_branch
          %628 = sbr.rel (%p626) target = $region124
        $region123: #{input_x_attention.1} parent=71 // pred_region
          %629 = dma.done [#allocation22], 16
        $region124: #{input_x_attention.1} parent=71 // pred_fallthru
          _
        %s630 = sand.u32 %s60, 1
        %s631 = scalar_lea.sflag [#allocation4], %s630
        %s632 = sand.u32 %s60, 1
        %s633 = smul.addr %s632, 8
        %s634 = scalar_lea.vmem [#allocation3], %s633
        %p635 = pneg %p73
        %p636 = pneg %p70
        %s637 = sand.u32 %s38, 1
        %s638 = scalar_lea.sflag [#allocation7], %s637
        %s639 = sand.u32 %s86, 1
        %s640 = smul.addr %s639, 16
        %s641 = scalar_lea.vmem [#allocation6], %s640
        %p642 = pneg %p99
        %p643 = pneg %p96
        %s644 = sand.u32 %s38, 1
        %s645 = scalar_lea.sflag [#allocation7], %s644
        %s646 = sand.u32 %s112, 1
        %s647 = scalar_lea.vmem [#allocation8], %s646
        %p648 = pneg %p125
        %p649 = pneg %p122
        %p650 = pneg %p146
        %p651 = pneg %p143
        %p652 = pneg %p167
        %p653 = pneg %p164
        %p654 = pneg %p188
        %p655 = pneg %p185
        %p656 = pneg %p209
        %p657 = pneg %p206
        %p658 = pneg %p230
        %p659 = pneg %p227
        %p660 = pneg %p251
        %p661 = pneg %p248
        %p662 = pneg %p272
        %p663 = pneg %p269
        %p664 = pneg %p293
        %p665 = pneg %p290
        %p666 = pneg %p314
        %p667 = pneg %p311
        %p668 = pneg %p335
        %p669 = pneg %p332
        %p670 = pneg %p363
        %p671 = pneg %p360
        %s672 = sand.u32 %s350, 1
        %s673 = scalar_lea.sflag [#allocation5], %s672
        %s674 = sand.u32 %s350, 1
        %s675 = smul.addr %s674, 8
        %s676 = scalar_lea.vmem [#allocation24], %s675
        %v678 = vld [vmem:[%s568] sm:$0xff]
        %v679 = vpack.c.bf16 %v678, %v678
        %v680 = vld [vmem:[%s577] sm:$0xff]
        %v681 = vld [vmem:[%s577 + $0x8] sm:$0xff]
        %v682 = vpack.c.bf16 %v681, %v680
        %v683 = vld [vmem:[#allocation9] sm:$0xf]
        %v684 = vld [vmem:[#allocation9 + $0x4] sm:$0xf]
        %v685 = vld [vmem:[#allocation9 + $0x8] sm:$0xf]
        %v686 = vld [vmem:[#allocation9 + $0xc] sm:$0xf]
        %v687 = vld [vmem:[#allocation11] sm:$0x1]
        %v689 = vlaneseq
        %v690 = vshrl.u32 %v689, 7
        %v691 = vsub.s32 0, %v690
        %v692 = vrot.slane %v687, %v691
        %v698 = vunpack.c.l.b16 %v683
        %v699 = vunpack.c.l.b16 %v684
        %v700 = vunpack.c.l.b16 %v685
        %v701 = vunpack.c.l.b16 %v686
        %v702 = vpack.c.b16 %v699, %v698
        %v703 = vpack.c.b16 %v701, %v700
        %vm706 = vcmask 261120
        %v708 = vsel %vm706, %v679, 0
        %710 = vmatprep.subr.bf16.mxu0 0
        %711 = vmatpush1.bf16.msra.mxu0 %v702
        %712 = vmatprep.subr.bf16.mxu0 0
        %713 = vmatpush1.bf16.msra.mxu0 %v703
        %714 = vmatprep.subr.bf16.mxu0 0
        %715 = vmatpush1.bf16.msra.mxu0 0
        %716 = vmatprep.subr.bf16.mxu0 0
        %717 = vmatpush1.bf16.msra.mxu0 0
        %718 = vmatprep.subr.bf16.mxu0 0
        %719 = vmatpush1.bf16.msra.mxu0 0
        %720 = vmatprep.subr.bf16.mxu0 0
        %721 = vmatpush1.bf16.msra.mxu0 0
        %722 = vmatprep.subr.bf16.mxu0 0
        %723 = vmatpush1.bf16.msra.mxu0 0
        %724 = vmatprep.subr.bf16.mxu0 0
        %725 = vmatpush1.bf16.msra.mxu0 0
        %726 = vmatprep.subr.bf16.mxu0 0
        %727 = vmatpush1.bf16.msra.mxu0 0
        %728 = vmatprep.subr.bf16.mxu0 0
        %729 = vmatpush1.bf16.msra.mxu0 0
        %730 = vmatprep.subr.bf16.mxu0 0
        %731 = vmatpush1.bf16.msra.mxu0 0
        %732 = vmatprep.subr.bf16.mxu0 0
        %733 = vmatpush1.bf16.msra.mxu0 0
        %734 = vmatprep.subr.bf16.mxu0 0
        %735 = vmatpush1.bf16.msra.mxu0 0
        %736 = vmatprep.subr.bf16.mxu0 0
        %737 = vmatpush1.bf16.msra.mxu0 0
        %738 = vmatprep.subr.bf16.mxu0 0
        %739 = vmatpush1.bf16.msra.mxu0 0
        %740 = vmatprep.subr.bf16.mxu0 0
        %741 = vmatpush1.bf16.msra.mxu0 0
        %742 = vmatprep.mubr.bf16.mxu0 0
        %743 = vmatmul.mubr.bf16.gmra.mrb[0].mxu0 %v708
        %v744 = vpop.f32.mrb[0].mxu0
        %v745 = vadd.f32 %v692, %v744
        %v746 = vpop.f32.mrb[0].mxu0
        %v747 = vpop.f32.mrb[0].mxu0
        %v748 = vpop.f32.mrb[0].mxu0
        %749 = vdwg.mxu0
        %v750 = vpack.c.bf16 %v745, %v745
        %v751 = vld [vmem:[#allocation12] sm:$0xf]
        %v752 = vld [vmem:[#allocation12 + $0x4] sm:$0xf]
        %v753 = vld [vmem:[#allocation12 + $0x8] sm:$0xf]
        %v754 = vld [vmem:[#allocation12 + $0xc] sm:$0xf]
        %v755 = vld [vmem:[#allocation14] sm:$0x1]
        %v757 = vlaneseq
        %v758 = vshrl.u32 %v757, 7
        %v759 = vsub.s32 0, %v758
        %v760 = vrot.slane %v755, %v759
        %v766 = vunpack.c.l.b16 %v751
        %v767 = vunpack.c.l.b16 %v752
        %v768 = vunpack.c.l.b16 %v753
        %v769 = vunpack.c.l.b16 %v754
        %v770 = vpack.c.b16 %v767, %v766
        %v771 = vpack.c.b16 %v769, %v768
        %v775 = vsel %vm706, %v682, 0
        %777 = vmatprep.subr.bf16.mxu0 0
        %778 = vmatpush1.bf16.msra.mxu0 %v770
        %779 = vmatprep.subr.bf16.mxu0 0
        %780 = vmatpush1.bf16.msra.mxu0 %v771
        %781 = vmatprep.subr.bf16.mxu0 0
        %782 = vmatpush1.bf16.msra.mxu0 0
        %783 = vmatprep.subr.bf16.mxu0 0
        %784 = vmatpush1.bf16.msra.mxu0 0
        %785 = vmatprep.subr.bf16.mxu0 0
        %786 = vmatpush1.bf16.msra.mxu0 0
        %787 = vmatprep.subr.bf16.mxu0 0
        %788 = vmatpush1.bf16.msra.mxu0 0
        %789 = vmatprep.subr.bf16.mxu0 0
        %790 = vmatpush1.bf16.msra.mxu0 0
        %791 = vmatprep.subr.bf16.mxu0 0
        %792 = vmatpush1.bf16.msra.mxu0 0
        %793 = vmatprep.subr.bf16.mxu0 0
        %794 = vmatpush1.bf16.msra.mxu0 0
        %795 = vmatprep.subr.bf16.mxu0 0
        %796 = vmatpush1.bf16.msra.mxu0 0
        %797 = vmatprep.subr.bf16.mxu0 0
        %798 = vmatpush1.bf16.msra.mxu0 0
        %799 = vmatprep.subr.bf16.mxu0 0
        %800 = vmatpush1.bf16.msra.mxu0 0
        %801 = vmatprep.subr.bf16.mxu0 0
        %802 = vmatpush1.bf16.msra.mxu0 0
        %803 = vmatprep.subr.bf16.mxu0 0
        %804 = vmatpush1.bf16.msra.mxu0 0
        %805 = vmatprep.subr.bf16.mxu0 0
        %806 = vmatpush1.bf16.msra.mxu0 0
        %807 = vmatprep.subr.bf16.mxu0 0
        %808 = vmatpush1.bf16.msra.mxu0 0
        %809 = vmatprep.mubr.bf16.mxu0 0
        %810 = vmatmul.mubr.bf16.gmra.mrb[0].mxu0 %v775
        %v811 = vpop.f32.mrb[0].mxu0
        %v812 = vadd.f32 %v760, %v811
        %v813 = vpop.f32.mrb[0].mxu0
        %v814 = vpop.f32.mrb[0].mxu0
        %v815 = vadd.f32 %v760, %v814
        %v816 = vpop.f32.mrb[0].mxu0
        %817 = vdwg.mxu0
        %v818 = vpack.c.bf16 %v815, %v812
        %v819 = vld [vmem:[%s585] sm:$0x1]
        %v821 = vlaneseq
        %v822 = vshrl.u32 %v821, 7
        %v823 = vsub.s32 0, %v822
        %v824 = vrot.slane %v819, %v823
        %vm826 = vcmask 64512
        %v828 = vsel %vm826, %v750, 0
        %v831 = vsel %vm826, %v818, 0
        %833 = vmatprep.subr.bf16.mxu0 0
        %834 = vmatpush1.bf16.xpose.msra.mxu0 %v831
        %835 = vmatprep.subr.bf16.mxu0 0
        %836 = vmatpush1.bf16.xpose.msra.mxu0 0
        %837 = vmatprep.subr.bf16.mxu0 0
        %838 = vmatpush1.bf16.xpose.msra.mxu0 0
        %839 = vmatprep.subr.bf16.mxu0 0
        %840 = vmatpush1.bf16.xpose.msra.mxu0 0
        %841 = vmatprep.subr.bf16.mxu0 0
        %842 = vmatpush1.bf16.xpose.msra.mxu0 0
        %843 = vmatprep.subr.bf16.mxu0 0
        %844 = vmatpush1.bf16.xpose.msra.mxu0 0
        %845 = vmatprep.subr.bf16.mxu0 0
        %846 = vmatpush1.bf16.xpose.msra.mxu0 0
        %847 = vmatprep.subr.bf16.mxu0 0
        %848 = vmatpush1.bf16.xpose.msra.mxu0 0
        %849 = vmatprep.subr.bf16.mxu0 0
        %850 = vmatpush1.bf16.xpose.msra.mxu0 0
        %851 = vmatprep.subr.bf16.mxu0 0
        %852 = vmatpush1.bf16.xpose.msra.mxu0 0
        %853 = vmatprep.subr.bf16.mxu0 0
        %854 = vmatpush1.bf16.xpose.msra.mxu0 0
        %855 = vmatprep.subr.bf16.mxu0 0
        %856 = vmatpush1.bf16.xpose.msra.mxu0 0
        %857 = vmatprep.subr.bf16.mxu0 0
        %858 = vmatpush1.bf16.xpose.msra.mxu0 0
        %859 = vmatprep.subr.bf16.mxu0 0
        %860 = vmatpush1.bf16.xpose.msra.mxu0 0
        %861 = vmatprep.subr.bf16.mxu0 0
        %862 = vmatpush1.bf16.xpose.msra.mxu0 0
        %863 = vmatprep.subr.bf16.mxu0 0
        %864 = vmatpush1.bf16.xpose.msra.mxu0 0
        %865 = vmatprep.mubr.bf16.mxu0 0
        %866 = vmatmul.mubr.bf16.gmra.mrb[0].mxu0 %v828
        %v867 = vpop.f32.mrb[0].mxu0
        %v868 = vadd.f32 %v824, %v867
        %v869 = vpop.f32.mrb[0].mxu0
        %v870 = vpop.f32.mrb[0].mxu0
        %v871 = vpop.f32.mrb[0].mxu0
        %872 = vdwg.mxu0
        %vm873 = vcmask 130048
        %v874 = vsel %vm873, %v868, -inf
        %875 = vmax.xlane.f32.xlu0 %v874
        %v876 = vpop.xlane.xlu0 %875
        %v877 = vsub.f32 %v868, %v876
        %v878 = vmul.f32 %v877, 1.442695
        %v879 = vpow.pop %v878
        %v880 = vsel %vm873, %v879, 0.0
        %881 = vadd.xlane.f32.xlu0 %v880
        %v882 = vpop.xlane.xlu0 %881
        %v883 = vpack.c.bf16 %v879, %v879
        %885 = vrot.lane.b32.xlu0 %v818, 96
        %v886 = vpop.permute.xlu0 %885
        %v889 = vsel %vm873, %v883, 0
        %891 = vmatprep.subr.bf16.mxu0 0
        %892 = vmatpush1.bf16.msra.mxu0 %v886
        %893 = vmatprep.subr.bf16.mxu0 0
        %894 = vmatpush1.bf16.msra.mxu0 0
        %895 = vmatprep.subr.bf16.mxu0 0
        %896 = vmatpush1.bf16.msra.mxu0 0
        %897 = vmatprep.subr.bf16.mxu0 0
        %898 = vmatpush1.bf16.msra.mxu0 0
        %899 = vmatprep.subr.bf16.mxu0 0
        %900 = vmatpush1.bf16.msra.mxu0 0
        %901 = vmatprep.subr.bf16.mxu0 0
        %902 = vmatpush1.bf16.msra.mxu0 0
        %903 = vmatprep.subr.bf16.mxu0 0
        %904 = vmatpush1.bf16.msra.mxu0 0
        %905 = vmatprep.subr.bf16.mxu0 0
        %906 = vmatpush1.bf16.msra.mxu0 0
        %907 = vmatprep.subr.bf16.mxu0 0
        %908 = vmatpush1.bf16.msra.mxu0 0
        %909 = vmatprep.subr.bf16.mxu0 0
        %910 = vmatpush1.bf16.msra.mxu0 0
        %911 = vmatprep.subr.bf16.mxu0 0
        %912 = vmatpush1.bf16.msra.mxu0 0
        %913 = vmatprep.subr.bf16.mxu0 0
        %914 = vmatpush1.bf16.msra.mxu0 0
        %915 = vmatprep.subr.bf16.mxu0 0
        %916 = vmatpush1.bf16.msra.mxu0 0
        %917 = vmatprep.subr.bf16.mxu0 0
        %918 = vmatpush1.bf16.msra.mxu0 0
        %919 = vmatprep.subr.bf16.mxu0 0
        %920 = vmatpush1.bf16.msra.mxu0 0
        %921 = vmatprep.subr.bf16.mxu0 0
        %922 = vmatpush1.bf16.msra.mxu0 0
        %923 = vmatprep.mubr.bf16.mxu0 0
        %924 = vmatmul.mubr.bf16.gmra.mrb[0].mxu0 %v889
        %v925 = vpop.f32.mrb[0].mxu0
        %v926 = vadd.f32 0.0, %v925
        %v927 = vpop.f32.mrb[0].mxu0
        %v928 = vpop.f32.mrb[0].mxu0
        %v929 = vpop.f32.mrb[0].mxu0
        %930 = vdwg.mxu0
        %v931 = vrcp.pop %v882
        %v932 = vmul.f32 %v926, %v931
        %v933 = vpack.c.bf16 %v932, %v932
        %vm934 = vcmask 60416
        %935 = vst.msk [vmem:[#allocation2] sm:$0xf] %vm934, %v933
        %937 = vrot.lane.b32.xlu0 %v750, 120
        %v938 = vpop.permute.xlu0 %937
        %939 = vrot.lane.b32.xlu0 %v818, 120
        %v940 = vpop.permute.xlu0 %939
        %v942 = vsel %vm826, %v938, 0
        %v945 = vsel %vm826, %v940, 0
        %947 = vmatprep.subr.bf16.mxu0 0
        %948 = vmatpush1.bf16.xpose.msra.mxu0 %v945
        %949 = vmatprep.subr.bf16.mxu0 0
        %950 = vmatpush1.bf16.xpose.msra.mxu0 0
        %951 = vmatprep.subr.bf16.mxu0 0
        %952 = vmatpush1.bf16.xpose.msra.mxu0 0
        %953 = vmatprep.subr.bf16.mxu0 0
        %954 = vmatpush1.bf16.xpose.msra.mxu0 0
        %955 = vmatprep.subr.bf16.mxu0 0
        %956 = vmatpush1.bf16.xpose.msra.mxu0 0
        %957 = vmatprep.subr.bf16.mxu0 0
        %958 = vmatpush1.bf16.xpose.msra.mxu0 0
        %959 = vmatprep.subr.bf16.mxu0 0
        %960 = vmatpush1.bf16.xpose.msra.mxu0 0
        %961 = vmatprep.subr.bf16.mxu0 0
        %962 = vmatpush1.bf16.xpose.msra.mxu0 0
        %963 = vmatprep.subr.bf16.mxu0 0
        %964 = vmatpush1.bf16.xpose.msra.mxu0 0
        %965 = vmatprep.subr.bf16.mxu0 0
        %966 = vmatpush1.bf16.xpose.msra.mxu0 0
        %967 = vmatprep.subr.bf16.mxu0 0
        %968 = vmatpush1.bf16.xpose.msra.mxu0 0
        %969 = vmatprep.subr.bf16.mxu0 0
        %970 = vmatpush1.bf16.xpose.msra.mxu0 0
        %971 = vmatprep.subr.bf16.mxu0 0
        %972 = vmatpush1.bf16.xpose.msra.mxu0 0
        %973 = vmatprep.subr.bf16.mxu0 0
        %974 = vmatpush1.bf16.xpose.msra.mxu0 0
        %975 = vmatprep.subr.bf16.mxu0 0
        %976 = vmatpush1.bf16.xpose.msra.mxu0 0
        %977 = vmatprep.subr.bf16.mxu0 0
        %978 = vmatpush1.bf16.xpose.msra.mxu0 0
        %979 = vmatprep.mubr.bf16.mxu0 0
        %980 = vmatmul.mubr.bf16.gmra.mrb[0].mxu0 %v942
        %v981 = vpop.f32.mrb[0].mxu0
        %v982 = vadd.f32 %v824, %v981
        %v983 = vpop.f32.mrb[0].mxu0
        %v984 = vpop.f32.mrb[0].mxu0
        %v985 = vpop.f32.mrb[0].mxu0
        %986 = vdwg.mxu0
        %v987 = vsel %vm873, %v982, -inf
        %988 = vmax.xlane.f32.xlu0 %v987
        %v989 = vpop.xlane.xlu0 %988
        %v990 = vsub.f32 %v982, %v989
        %v991 = vmul.f32 %v990, 1.442695
        %v992 = vpow.pop %v991
        %v993 = vsel %vm873, %v992, 0.0
        %994 = vadd.xlane.f32.xlu0 %v993
        %v995 = vpop.xlane.xlu0 %994
        %v996 = vpack.c.bf16 %v992, %v992
        %997 = vrot.lane.b32.xlu0 %v818, 88
        %v998 = vpop.permute.xlu0 %997
        %v1001 = vsel %vm873, %v996, 0
        %1003 = vmatprep.subr.bf16.mxu0 0
        %1004 = vmatpush1.bf16.msra.mxu0 %v998
        %1005 = vmatprep.subr.bf16.mxu0 0
        %1006 = vmatpush1.bf16.msra.mxu0 0
        %1007 = vmatprep.subr.bf16.mxu0 0
        %1008 = vmatpush1.bf16.msra.mxu0 0
        %1009 = vmatprep.subr.bf16.mxu0 0
        %1010 = vmatpush1.bf16.msra.mxu0 0
        %1011 = vmatprep.subr.bf16.mxu0 0
        %1012 = vmatpush1.bf16.msra.mxu0 0
        %1013 = vmatprep.subr.bf16.mxu0 0
        %1014 = vmatpush1.bf16.msra.mxu0 0
        %1015 = vmatprep.subr.bf16.mxu0 0
        %1016 = vmatpush1.bf16.msra.mxu0 0
        %1017 = vmatprep.subr.bf16.mxu0 0
        %1018 = vmatpush1.bf16.msra.mxu0 0
        %1019 = vmatprep.subr.bf16.mxu0 0
        %1020 = vmatpush1.bf16.msra.mxu0 0
        %1021 = vmatprep.subr.bf16.mxu0 0
        %1022 = vmatpush1.bf16.msra.mxu0 0
        %1023 = vmatprep.subr.bf16.mxu0 0
        %1024 = vmatpush1.bf16.msra.mxu0 0
        %1025 = vmatprep.subr.bf16.mxu0 0
        %1026 = vmatpush1.bf16.msra.mxu0 0
        %1027 = vmatprep.subr.bf16.mxu0 0
        %1028 = vmatpush1.bf16.msra.mxu0 0
        %1029 = vmatprep.subr.bf16.mxu0 0
        %1030 = vmatpush1.bf16.msra.mxu0 0
        %1031 = vmatprep.subr.bf16.mxu0 0
        %1032 = vmatpush1.bf16.msra.mxu0 0
        %1033 = vmatprep.subr.bf16.mxu0 0
        %1034 = vmatpush1.bf16.msra.mxu0 0
        %1035 = vmatprep.mubr.bf16.mxu0 0
        %1036 = vmatmul.mubr.bf16.gmra.mrb[0].mxu0 %v1001
        %v1037 = vpop.f32.mrb[0].mxu0
        %v1038 = vadd.f32 0.0, %v1037
        %v1039 = vpop.f32.mrb[0].mxu0
        %v1040 = vpop.f32.mrb[0].mxu0
        %v1041 = vpop.f32.mrb[0].mxu0
        %1042 = vdwg.mxu0
        %v1043 = vrcp.pop %v995
        %v1044 = vmul.f32 %v1038, %v1043
        %v1045 = vpack.c.bf16 %v1044, %v1044
        %v1047 = vunpack.c.l.b16 %v1045
        %v1048 = vpack.c.b16 %v1047, %v1047
        %1049 = vrot.lane.b32.xlu0 %v1048, 8
        %v1050 = vpop.permute.xlu0 %1049
        %vm1052 = vcmask 126016
        %1053 = vst.msk [vmem:[#allocation2] sm:$0xf] %vm1052, %v1050
        %1054 = vrot.lane.b32.xlu0 %v750, 112
        %v1055 = vpop.permute.xlu0 %1054
        %1056 = vrot.lane.b32.xlu0 %v818, 112
        %v1057 = vpop.permute.xlu0 %1056
        %v1059 = vsel %vm826, %v1055, 0
        %v1062 = vsel %vm826, %v1057, 0
        %1064 = vmatprep.subr.bf16.mxu0 0
        %1065 = vmatpush1.bf16.xpose.msra.mxu0 %v1062
        %1066 = vmatprep.subr.bf16.mxu0 0
        %1067 = vmatpush1.bf16.xpose.msra.mxu0 0
        %1068 = vmatprep.subr.bf16.mxu0 0
        %1069 = vmatpush1.bf16.xpose.msra.mxu0 0
        %1070 = vmatprep.subr.bf16.mxu0 0
        %1071 = vmatpush1.bf16.xpose.msra.mxu0 0
        %1072 = vmatprep.subr.bf16.mxu0 0
        %1073 = vmatpush1.bf16.xpose.msra.mxu0 0
        %1074 = vmatprep.subr.bf16.mxu0 0
        %1075 = vmatpush1.bf16.xpose.msra.mxu0 0
        %1076 = vmatprep.subr.bf16.mxu0 0
        %1077 = vmatpush1.bf16.xpose.msra.mxu0 0
        %1078 = vmatprep.subr.bf16.mxu0 0
        %1079 = vmatpush1.bf16.xpose.msra.mxu0 0
        %1080 = vmatprep.subr.bf16.mxu0 0
        %1081 = vmatpush1.bf16.xpose.msra.mxu0 0
        %1082 = vmatprep.subr.bf16.mxu0 0
        %1083 = vmatpush1.bf16.xpose.msra.mxu0 0
        %1084 = vmatprep.subr.bf16.mxu0 0
        %1085 = vmatpush1.bf16.xpose.msra.mxu0 0
        %1086 = vmatprep.subr.bf16.mxu0 0
        %1087 = vmatpush1.bf16.xpose.msra.mxu0 0
        %1088 = vmatprep.subr.bf16.mxu0 0
        %1089 = vmatpush1.bf16.xpose.msra.mxu0 0
        %1090 = vmatprep.subr.bf16.mxu0 0
        %1091 = vmatpush1.bf16.xpose.msra.mxu0 0
        %1092 = vmatprep.subr.bf16.mxu0 0
        %1093 = vmatpush1.bf16.xpose.msra.mxu0 0
        %1094 = vmatprep.subr.bf16.mxu0 0
        %1095 = vmatpush1.bf16.xpose.msra.mxu0 0
        %1096 = vmatprep.mubr.bf16.mxu0 0
        %1097 = vmatmul.mubr.bf16.gmra.mrb[0].mxu0 %v1059
        %v1098 = vpop.f32.mrb[0].mxu0
        %v1099 = vadd.f32 %v824, %v1098
        %v1100 = vpop.f32.mrb[0].mxu0
        %v1101 = vpop.f32.mrb[0].mxu0
        %v1102 = vpop.f32.mrb[0].mxu0
        %1103 = vdwg.mxu0
        %v1104 = vsel %vm873, %v1099, -inf
        %1105 = vmax.xlane.f32.xlu0 %v1104
        %v1106 = vpop.xlane.xlu0 %1105
        %v1107 = vsub.f32 %v1099, %v1106
        %v1108 = vmul.f32 %v1107, 1.442695
        %v1109 = vpow.pop %v1108
        %v1110 = vsel %vm873, %v1109, 0.0
        %1111 = vadd.xlane.f32.xlu0 %v1110
        %v1112 = vpop.xlane.xlu0 %1111
        %v1113 = vpack.c.bf16 %v1109, %v1109
        %1114 = vrot.lane.b32.xlu0 %v818, 80
        %v1115 = vpop.permute.xlu0 %1114
        %v1118 = vsel %vm873, %v1113, 0
        %1120 = vmatprep.subr.bf16.mxu0 0
        %1121 = vmatpush1.bf16.msra.mxu0 %v1115
        %1122 = vmatprep.subr.bf16.mxu0 0
        %1123 = vmatpush1.bf16.msra.mxu0 0
        %1124 = vmatprep.subr.bf16.mxu0 0
        %1125 = vmatpush1.bf16.msra.mxu0 0
        %1126 = vmatprep.subr.bf16.mxu0 0
        %1127 = vmatpush1.bf16.msra.mxu0 0
        %1128 = vmatprep.subr.bf16.mxu0 0
        %1129 = vmatpush1.bf16.msra.mxu0 0
        %1130 = vmatprep.subr.bf16.mxu0 0
        %1131 = vmatpush1.bf16.msra.mxu0 0
        %1132 = vmatprep.subr.bf16.mxu0 0
        %1133 = vmatpush1.bf16.msra.mxu0 0
        %1134 = vmatprep.subr.bf16.mxu0 0
        %1135 = vmatpush1.bf16.msra.mxu0 0
        %1136 = vmatprep.subr.bf16.mxu0 0
        %1137 = vmatpush1.bf16.msra.mxu0 0
        %1138 = vmatprep.subr.bf16.mxu0 0
        %1139 = vmatpush1.bf16.msra.mxu0 0
        %1140 = vmatprep.subr.bf16.mxu0 0
        %1141 = vmatpush1.bf16.msra.mxu0 0
        %1142 = vmatprep.subr.bf16.mxu0 0
        %1143 = vmatpush1.bf16.msra.mxu0 0
        %1144 = vmatprep.subr.bf16.mxu0 0
        %1145 = vmatpush1.bf16.msra.mxu0 0
        %1146 = vmatprep.subr.bf16.mxu0 0
        %1147 = vmatpush1.bf16.msra.mxu0 0
        %1148 = vmatprep.subr.bf16.mxu0 0
        %1149 = vmatpush1.bf16.msra.mxu0 0
        %1150 = vmatprep.subr.bf16.mxu0 0
        %1151 = vmatpush1.bf16.msra.mxu0 0
        %1152 = vmatprep.mubr.bf16.mxu0 0
        %1153 = vmatmul.mubr.bf16.gmra.mrb[0].mxu0 %v1118
        %v1154 = vpop.f32.mrb[0].mxu0
        %v1155 = vadd.f32 0.0, %v1154
        %v1156 = vpop.f32.mrb[0].mxu0
        %v1157 = vpop.f32.mrb[0].mxu0
        %v1158 = vpop.f32.mrb[0].mxu0
        %1159 = vdwg.mxu0
        %v1160 = vrcp.pop %v1112
        %v1161 = vmul.f32 %v1155, %v1160
        %v1162 = vpack.c.bf16 %v1161, %v1161
        %v1164 = vunpack.c.l.b16 %v1162
        %v1165 = vpack.c.b16 %v1164, %v1164
        %1166 = vrot.lane.b32.xlu0 %v1165, 16
        %v1167 = vpop.permute.xlu0 %1166
        %vm1169 = vcmask 191616
        %1170 = vst.msk [vmem:[#allocation2] sm:$0xf] %vm1169, %v1167
        %1171 = vrot.lane.b32.xlu0 %v750, 104
        %v1172 = vpop.permute.xlu0 %1171
        %1173 = vrot.lane.b32.xlu0 %v818, 104
        %v1174 = vpop.permute.xlu0 %1173
        %v1176 = vsel %vm826, %v1172, 0
        %v1179 = vsel %vm826, %v1174, 0
        %1181 = vmatprep.subr.bf16.mxu0 0
        %1182 = vmatpush1.bf16.xpose.msra.mxu0 %v1179
        %1183 = vmatprep.subr.bf16.mxu0 0
        %1184 = vmatpush1.bf16.xpose.msra.mxu0 0
        %1185 = vmatprep.subr.bf16.mxu0 0
        %1186 = vmatpush1.bf16.xpose.msra.mxu0 0
        %1187 = vmatprep.subr.bf16.mxu0 0
        %1188 = vmatpush1.bf16.xpose.msra.mxu0 0
        %1189 = vmatprep.subr.bf16.mxu0 0
        %1190 = vmatpush1.bf16.xpose.msra.mxu0 0
        %1191 = vmatprep.subr.bf16.mxu0 0
        %1192 = vmatpush1.bf16.xpose.msra.mxu0 0
        %1193 = vmatprep.subr.bf16.mxu0 0
        %1194 = vmatpush1.bf16.xpose.msra.mxu0 0
        %1195 = vmatprep.subr.bf16.mxu0 0
        %1196 = vmatpush1.bf16.xpose.msra.mxu0 0
        %1197 = vmatprep.subr.bf16.mxu0 0
        %1198 = vmatpush1.bf16.xpose.msra.mxu0 0
        %1199 = vmatprep.subr.bf16.mxu0 0
        %1200 = vmatpush1.bf16.xpose.msra.mxu0 0
        %1201 = vmatprep.subr.bf16.mxu0 0
        %1202 = vmatpush1.bf16.xpose.msra.mxu0 0
        %1203 = vmatprep.subr.bf16.mxu0 0
        %1204 = vmatpush1.bf16.xpose.msra.mxu0 0
        %1205 = vmatprep.subr.bf16.mxu0 0
        %1206 = vmatpush1.bf16.xpose.msra.mxu0 0
        %1207 = vmatprep.subr.bf16.mxu0 0
        %1208 = vmatpush1.bf16.xpose.msra.mxu0 0
        %1209 = vmatprep.subr.bf16.mxu0 0
        %1210 = vmatpush1.bf16.xpose.msra.mxu0 0
        %1211 = vmatprep.subr.bf16.mxu0 0
        %1212 = vmatpush1.bf16.xpose.msra.mxu0 0
        %1213 = vmatprep.mubr.bf16.mxu0 0
        %1214 = vmatmul.mubr.bf16.gmra.mrb[0].mxu0 %v1176
        %v1215 = vpop.f32.mrb[0].mxu0
        %v1216 = vadd.f32 %v824, %v1215
        %v1217 = vpop.f32.mrb[0].mxu0
        %v1218 = vpop.f32.mrb[0].mxu0
        %v1219 = vpop.f32.mrb[0].mxu0
        %1220 = vdwg.mxu0
        %v1221 = vsel %vm873, %v1216, -inf
        %1222 = vmax.xlane.f32.xlu0 %v1221
        %v1223 = vpop.xlane.xlu0 %1222
        %v1224 = vsub.f32 %v1216, %v1223
        %v1225 = vmul.f32 %v1224, 1.442695
        %v1226 = vpow.pop %v1225
        %v1227 = vsel %vm873, %v1226, 0.0
        %1228 = vadd.xlane.f32.xlu0 %v1227
        %v1229 = vpop.xlane.xlu0 %1228
        %v1230 = vpack.c.bf16 %v1226, %v1226
        %1231 = vrot.lane.b32.xlu0 %v818, 72
        %v1232 = vpop.permute.xlu0 %1231
        %v1235 = vsel %vm873, %v1230, 0
        %1237 = vmatprep.subr.bf16.mxu0 0
        %1238 = vmatpush1.bf16.msra.mxu0 %v1232
        %1239 = vmatprep.subr.bf16.mxu0 0
        %1240 = vmatpush1.bf16.msra.mxu0 0
        %1241 = vmatprep.subr.bf16.mxu0 0
        %1242 = vmatpush1.bf16.msra.mxu0 0
        %1243 = vmatprep.subr.bf16.mxu0 0
        %1244 = vmatpush1.bf16.msra.mxu0 0
        %1245 = vmatprep.subr.bf16.mxu0 0
        %1246 = vmatpush1.bf16.msra.mxu0 0
        %1247 = vmatprep.subr.bf16.mxu0 0
        %1248 = vmatpush1.bf16.msra.mxu0 0
        %1249 = vmatprep.subr.bf16.mxu0 0
        %1250 = vmatpush1.bf16.msra.mxu0 0
        %1251 = vmatprep.subr.bf16.mxu0 0
        %1252 = vmatpush1.bf16.msra.mxu0 0
        %1253 = vmatprep.subr.bf16.mxu0 0
        %1254 = vmatpush1.bf16.msra.mxu0 0
        %1255 = vmatprep.subr.bf16.mxu0 0
        %1256 = vmatpush1.bf16.msra.mxu0 0
        %1257 = vmatprep.subr.bf16.mxu0 0
        %1258 = vmatpush1.bf16.msra.mxu0 0
        %1259 = vmatprep.subr.bf16.mxu0 0
        %1260 = vmatpush1.bf16.msra.mxu0 0
        %1261 = vmatprep.subr.bf16.mxu0 0
        %1262 = vmatpush1.bf16.msra.mxu0 0
        %1263 = vmatprep.subr.bf16.mxu0 0
        %1264 = vmatpush1.bf16.msra.mxu0 0
        %1265 = vmatprep.subr.bf16.mxu0 0
        %1266 = vmatpush1.bf16.msra.mxu0 0
        %1267 = vmatprep.subr.bf16.mxu0 0
        %1268 = vmatpush1.bf16.msra.mxu0 0
        %1269 = vmatprep.mubr.bf16.mxu0 0
        %1270 = vmatmul.mubr.bf16.gmra.mrb[0].mxu0 %v1235
        %v1271 = vpop.f32.mrb[0].mxu0
        %v1272 = vadd.f32 0.0, %v1271
        %v1273 = vpop.f32.mrb[0].mxu0
        %v1274 = vpop.f32.mrb[0].mxu0
        %v1275 = vpop.f32.mrb[0].mxu0
        %1276 = vdwg.mxu0
        %v1277 = vrcp.pop %v1229
        %v1278 = vmul.f32 %v1272, %v1277
        %v1279 = vpack.c.bf16 %v1278, %v1278
        %v1281 = vunpack.c.l.b16 %v1279
        %v1282 = vpack.c.b16 %v1281, %v1281
        %1283 = vrot.lane.b32.xlu0 %v1282, 24
        %v1284 = vpop.permute.xlu0 %1283
        %vm1286 = vcmask 257216
        %1287 = vst.msk [vmem:[#allocation2] sm:$0xf] %vm1286, %v1284
        %v1288 = vld [vmem:[#allocation2] sm:$0xf]
        %v1289 = vld [vmem:[#allocation15] sm:$0xf]
        %v1290 = vld [vmem:[#allocation15 + $0x4] sm:$0xf]
        %v1291 = vld [vmem:[#allocation15 + $0x8] sm:$0xf]
        %v1292 = vld [vmem:[#allocation15 + $0xc] sm:$0xf]
        %v1293 = vld [vmem:[#allocation17] sm:$0x1]
        %v1295 = vlaneseq
        %v1296 = vshrl.u32 %v1295, 7
        %v1297 = vsub.s32 0, %v1296
        %v1298 = vrot.slane %v1293, %v1297
        %v1304 = vunpack.c.l.b16 %v1289
        %v1305 = vunpack.c.l.b16 %v1290
        %v1306 = vunpack.c.l.b16 %v1291
        %v1307 = vunpack.c.l.b16 %v1292
        %v1308 = vpack.c.b16 %v1305, %v1304
        %v1309 = vpack.c.b16 %v1307, %v1306
        %v1313 = vsel %vm706, %v1288, 0
        %1315 = vmatprep.subr.bf16.mxu0 0
        %1316 = vmatpush1.bf16.msra.mxu0 %v1308
        %1317 = vmatprep.subr.bf16.mxu0 0
        %1318 = vmatpush1.bf16.msra.mxu0 %v1309
        %1319 = vmatprep.subr.bf16.mxu0 0
        %1320 = vmatpush1.bf16.msra.mxu0 0
        %1321 = vmatprep.subr.bf16.mxu0 0
        %1322 = vmatpush1.bf16.msra.mxu0 0
        %1323 = vmatprep.subr.bf16.mxu0 0
        %1324 = vmatpush1.bf16.msra.mxu0 0
        %1325 = vmatprep.subr.bf16.mxu0 0
        %1326 = vmatpush1.bf16.msra.mxu0 0
        %1327 = vmatprep.subr.bf16.mxu0 0
        %1328 = vmatpush1.bf16.msra.mxu0 0
        %1329 = vmatprep.subr.bf16.mxu0 0
        %1330 = vmatpush1.bf16.msra.mxu0 0
        %1331 = vmatprep.subr.bf16.mxu0 0
        %1332 = vmatpush1.bf16.msra.mxu0 0
        %1333 = vmatprep.subr.bf16.mxu0 0
        %1334 = vmatpush1.bf16.msra.mxu0 0
        %1335 = vmatprep.subr.bf16.mxu0 0
        %1336 = vmatpush1.bf16.msra.mxu0 0
        %1337 = vmatprep.subr.bf16.mxu0 0
        %1338 = vmatpush1.bf16.msra.mxu0 0
        %1339 = vmatprep.subr.bf16.mxu0 0
        %1340 = vmatpush1.bf16.msra.mxu0 0
        %1341 = vmatprep.subr.bf16.mxu0 0
        %1342 = vmatpush1.bf16.msra.mxu0 0
        %1343 = vmatprep.subr.bf16.mxu0 0
        %1344 = vmatpush1.bf16.msra.mxu0 0
        %1345 = vmatprep.subr.bf16.mxu0 0
        %1346 = vmatpush1.bf16.msra.mxu0 0
        %1347 = vmatprep.mubr.bf16.mxu0 0
        %1348 = vmatmul.mubr.bf16.gmra.mrb[0].mxu0 %v1313
        %v1349 = vpop.f32.mrb[0].mxu0
        %v1350 = vadd.f32 %v1298, %v1349
        %v1351 = vpop.f32.mrb[0].mxu0
        %v1352 = vpop.f32.mrb[0].mxu0
        %v1353 = vpop.f32.mrb[0].mxu0
        %1354 = vdwg.mxu0
        %v1355 = vpack.c.bf16 %v1350, %v1350
        %v1356 = vld [vmem:[#allocation18] sm:$0xf]
        %v1357 = vld [vmem:[#allocation18 + $0x4] sm:$0xf]
        %v1358 = vld [vmem:[#allocation18 + $0x8] sm:$0xf]
        %v1359 = vld [vmem:[#allocation18 + $0xc] sm:$0xf]
        %v1360 = vld [vmem:[#allocation20] sm:$0x1]
        %v1362 = vlaneseq
        %v1363 = vshrl.u32 %v1362, 7
        %v1364 = vsub.s32 0, %v1363
        %v1365 = vrot.slane %v1360, %v1364
        %v1371 = vunpack.c.l.b16 %v1356
        %v1372 = vunpack.c.l.b16 %v1357
        %v1373 = vunpack.c.l.b16 %v1358
        %v1374 = vunpack.c.l.b16 %v1359
        %v1375 = vpack.c.b16 %v1372, %v1371
        %v1376 = vpack.c.b16 %v1374, %v1373
        %v1380 = vsel %vm706, %v1355, 0
        %1382 = vmatprep.subr.bf16.mxu0 0
        %1383 = vmatpush1.bf16.msra.mxu0 %v1375
        %1384 = vmatprep.subr.bf16.mxu0 0
        %1385 = vmatpush1.bf16.msra.mxu0 %v1376
        %1386 = vmatprep.subr.bf16.mxu0 0
        %1387 = vmatpush1.bf16.msra.mxu0 0
        %1388 = vmatprep.subr.bf16.mxu0 0
        %1389 = vmatpush1.bf16.msra.mxu0 0
        %1390 = vmatprep.subr.bf16.mxu0 0
        %1391 = vmatpush1.bf16.msra.mxu0 0
        %1392 = vmatprep.subr.bf16.mxu0 0
        %1393 = vmatpush1.bf16.msra.mxu0 0
        %1394 = vmatprep.subr.bf16.mxu0 0
        %1395 = vmatpush1.bf16.msra.mxu0 0
        %1396 = vmatprep.subr.bf16.mxu0 0
        %1397 = vmatpush1.bf16.msra.mxu0 0
        %1398 = vmatprep.subr.bf16.mxu0 0
        %1399 = vmatpush1.bf16.msra.mxu0 0
        %1400 = vmatprep.subr.bf16.mxu0 0
        %1401 = vmatpush1.bf16.msra.mxu0 0
        %1402 = vmatprep.subr.bf16.mxu0 0
        %1403 = vmatpush1.bf16.msra.mxu0 0
        %1404 = vmatprep.subr.bf16.mxu0 0
        %1405 = vmatpush1.bf16.msra.mxu0 0
        %1406 = vmatprep.subr.bf16.mxu0 0
        %1407 = vmatpush1.bf16.msra.mxu0 0
        %1408 = vmatprep.subr.bf16.mxu0 0
        %1409 = vmatpush1.bf16.msra.mxu0 0
        %1410 = vmatprep.subr.bf16.mxu0 0
        %1411 = vmatpush1.bf16.msra.mxu0 0
        %1412 = vmatprep.subr.bf16.mxu0 0
        %1413 = vmatpush1.bf16.msra.mxu0 0
        %1414 = vmatprep.mubr.bf16.mxu0 0
        %1415 = vmatmul.mubr.bf16.gmra.mrb[0].mxu0 %v1380
        %v1416 = vpop.f32.mrb[0].mxu0
        %v1417 = vadd.f32 %v1365, %v1416
        %v1418 = vpop.f32.mrb[0].mxu0
        %v1419 = vpop.f32.mrb[0].mxu0
        %v1420 = vpop.f32.mrb[0].mxu0
        %1421 = vdwg.mxu0
        %v1422 = vadd.f32 %v1417, %v678
        %v1423 = vsel %vm706, %v1422, 0.0
        %1424 = vadd.xlane.f32.xlu0 %v1423
        %v1425 = vpop.xlane.xlu0 %1424
        %v1426 = vrcp.pop 32.0
        %v1427 = vmul.f32 %v1425, %v1426
        %v1428 = vsub.f32 %v1422, %v1427
        %v1429 = vmul.f32 %v1428, %v1428
        %v1430 = vsel %vm706, %v1429, 0.0
        %1431 = vadd.xlane.f32.xlu0 %v1430
        %v1432 = vpop.xlane.xlu0 %1431
        %v1433 = vmul.f32 %v1432, %v1426
        %v1434 = vadd.f32 %v1433, 1e-12
        %v1435 = vrsqrt.pop %v1434
        %v1436 = vmul.f32 %v1428, %v1435
        %v1437 = vld [vmem:[#allocation21] sm:$0x1]
        %v1439 = vlaneseq
        %v1440 = vshrl.u32 %v1439, 7
        %v1441 = vsub.s32 0, %v1440
        %v1442 = vrot.slane %v1437, %v1441
        %v1444 = vmul.f32 %v1436, %v1442
        %v1445 = vld [vmem:[#allocation23] sm:$0x1]
        %v1447 = vlaneseq
        %v1448 = vshrl.u32 %v1447, 7
        %v1449 = vsub.s32 0, %v1448
        %v1450 = vrot.slane %v1445, %v1449
        %v1452 = vadd.f32 %v1444, %v1450
        %v1453 = vadd.f32 %v1350, %v1452
        %1454 = vst.msk [vmem:[%s676] sm:$0xff] %vm706, %v1453
        %s1455 = sand.u32 %s350, 1
        %s1456 = scalar_lea.sflag [#allocation5], %s1455
        %s1457 = sand.u32 %s350, 1
        %s1458 = smul.addr %s1457, 8
        %s1459 = scalar_lea.vmem [#allocation24], %s1458
        // Predicated region
        $region125: #{input_x_attention.1} parent=71 // pred_check
          %p1460 = pneg %p360
        $region126: #{input_x_attention.1} parent=71 // pred_check_branch
          %1462 = sbr.rel (%p1460) target = $region128
        $region127: #{input_x_attention.1} parent=71 // pred_region
          %s1464 = ssub.s32 128, 128
          %1465 = vsyncadd %s1456, %s1464
          %s1466 = sadd.s32 %s43, %s42
          %s1467 = smul.addr %s1466, 128
          %s1468 = scalar_lea.hbm %s13, %s1467
          %s1470 = sshll.u32 %s1459, 4
          %s1471 = int_to_ptr.vmem [resolvable:$true] %s1470
          %1473 = dma.vmem_to_hbm [thread:$0]  %s1471, 128, %s1468, %s1456
        $region128: #{input_x_attention.1} parent=71 // pred_fallthru
          _
      $region72: #{input_x_attention.1} parent=5 // pred_fallthru
        _
      %p1474 = scmp.le.s32.totalorder 2, %s33
      // Predicated region
      $region129: #{input_x_attention.1} parent=5 // pred_check
        %p1475 = pneg %p1474
      $region130: #{input_x_attention.1} parent=5 // pred_check_branch
        %1477 = sbr.rel (%p1475) target = $region132
      $region131: #{input_x_attention.1} parent=5 // pred_region
        %s1478 = ssub.s32 %s33, 2
        // Predicated region
        $region133: #{input_x_attention.1} parent=131 // pred_check
          %p1479 = pneg %p366
        $region134: #{input_x_attention.1} parent=131 // pred_check_branch
          %1481 = sbr.rel (%p1479) target = $region136
        $region135: #{input_x_attention.1} parent=131 // pred_region
          %s1482 = sand.u32 %s351, 1
          %s1483 = scalar_lea.sflag [#allocation5], %s1482
          %s1484 = sand.u32 %s351, 1
          %s1485 = smul.addr %s1484, 8
          %s1486 = scalar_lea.vmem [#allocation24], %s1485
          %1487 = dma.done %s1483, 128
        $region136: #{input_x_attention.1} parent=131 // pred_fallthru
          _
      $region132: #{input_x_attention.1} parent=5 // pred_fallthru
        _
    $region6: #{input_x_attention.1} parent=1 // loop_footer
      %s37 = sadd.s32 1, %s33
    $region7: #{input_x_attention.1} parent=1 // loop_footer_branch
      %32 = sbr.rel target = $region3
    $region8: #{input_x_attention.1} parent=1 // loop_exit
      _
    %1488 = vsyncpa [#allocation4], 1
    %s1489 = scalar_lea.sflag [#allocation4], 1
    %1490 = vsyncpa %s1489, 1
    %1491 = vsyncpa [#allocation7], 1
    %s1492 = scalar_lea.sflag [#allocation7], 1
    %1493 = vsyncpa %s1492, 1
    %1494 = vsyncpa [#allocation10], 1
    %1495 = vsyncpa [#allocation13], 1
    %1496 = vsyncpa [#allocation16], 1
    %1497 = vsyncpa [#allocation19], 1
    %1498 = vsyncpa [#allocation22], 1
    %1499 = vsyncpa [#allocation5], 1
    %s1500 = scalar_lea.sflag [#allocation5], 1
    %1501 = vsyncpa %s1500, 1

</llo_original>
